<compile_context>
chip_gen: v6e
topology: v6e:2x2x1
jax: 0.10.0
libtpu: 0.0.40
codegen_flags: <defaults>
</compile_context>

<pallas_src>
import functools
import math

import jax
import jax.numpy as jnp
from jax import lax
from jax.experimental import pallas as pl
from jax.experimental.pallas import tpu as pltpu
from jax.scipy.linalg import expm as _scipy_expm

MATRIX_SIZE = 4
EXPM_SQUARINGS = 4        # scale A by 2^-4 (folded into w2), square 4 times
EXPM_TAYLOR_DEGREE = 8    # Paterson-Stockmeyer degree-8 Taylor for exp(A/16)

_INV_FACT = tuple(1.0 / math.factorial(k) for k in range(EXPM_TAYLOR_DEGREE + 1))


def _bmm_lanes(a, b):
    """Batched m x m matmul with the batch on the lane (last) axis.

    a, b: (m, m, N);  c[i, k, n] = sum_j a[i, j, n] * b[j, k, n].
    Pure VPU broadcast-multiply + adds; no MXU push/pop, no cross-lane traffic.
    """
    return jnp.sum(a[:, :, None, :] * b[None, :, :, :], axis=1)


def _identity_lanes(m, n):
    """(m, m, n): the m x m identity replicated across n lanes (built once)."""
    ii = lax.broadcasted_iota(jnp.int32, (m, m, n), 0)
    jj = lax.broadcasted_iota(jnp.int32, (m, m, n), 1)
    return jnp.where(ii == jj, 1.0, 0.0).astype(jnp.float32)


def _matexp_lanes(a_s, eye):
    """exp(2^EXPM_SQUARINGS * a_s) for a batch of m x m matrices, (m, m, N) layout.

    a_s is ALREADY pre-scaled by 2^-EXPM_SQUARINGS (folded into the l2 weight).
    Degree-8 Taylor evaluated with Paterson-Stockmeyer (A2/A4 Horner), then
    EXPM_SQUARINGS repeated squarings.  exp(0) == I exactly, so PyTorch's
    "skip all-zero position" branch (l1/l2 are bias-free) stays a mathematical
    no-op when reproduced as a multiply by I.
    """
    # TODO(synk): fixed 2^-4 scaling + degree-8 PS Taylor, not the norm-adaptive
    # Pade-13 of torch.matrix_exp; accurate (<1e-6) for the moderate norms here.
    c = _INV_FACT
    a2 = _bmm_lanes(a_s, a_s)
    a3 = _bmm_lanes(a2, a_s)
    a4 = _bmm_lanes(a2, a2)
    p_lo = eye + a_s + c[2] * a2 + c[3] * a3
    p_hi = c[4] * eye + c[5] * a_s + c[6] * a2 + c[7] * a3 + c[8] * a4
    acc = p_lo + _bmm_lanes(a4, p_hi)          # = sum_{k=0}^{8} a_s^k / k!
    for _ in range(EXPM_SQUARINGS):
        acc = _bmm_lanes(acc, acc)
    return acc


def matrixnet_kernel(we_ref, w1t_ref, w2t_ref, wpt_ref, bp_ref, out_ref, *, B, L):
    m = MATRIX_SIZE
    n = B * L

    # ---- 1. Batched MLP over all B*L positions: 2 tiny MXU matmuls. -------
    x = we_ref[...]                                                          # (N, G)
    h = jnp.maximum(
        jnp.dot(x, w1t_ref[...], preferred_element_type=jnp.float32), 0.0)   # (N, H)
    # Contract on H so the result comes out directly in the lane-batched
    # (m*m, N) layout; w2t is pre-scaled by 2^-EXPM_SQUARINGS off the hot path.
    a_t = lax.dot_general(w2t_ref[...], h, (((0,), (1,)), ((), ())),
                          preferred_element_type=jnp.float32)                # (m*m, N)
    a_s = a_t.reshape(m, m, n)                                               # (m, m, N)

    # ---- 2. All matrix exponentials at once (VPU bmms, batch on lanes). ---
    eye = _identity_lanes(m, n)
    mats = _matexp_lanes(a_s, eye)                                           # (m, m, N)

    # ---- 3. Sequence product: log-depth shifted-multiply scan. ------------
    # Lane q holds position q % L of batch q // L.  After ceil(log2(L))
    # levels, lane b*L holds  M_{b,0} @ M_{b,1} @ ... @ M_{b,L-1}.
    # NOTE: pltpu.roll (XLU lane rotate) is not used: the lane dim is B*L=16
    # and the Mosaic rotate lowering needs (8,128)-aligned shapes; the
    # slice+concat shift is kept for robustness at this tiny size.
    pos_in_seq = lax.broadcasted_iota(jnp.int32, (m, m, n), 2) % L
    X = mats
    s = 1
    while s < L:
        shifted = jnp.concatenate([X[:, :, s:], X[:, :, :s]], axis=2)   # X[q + s]
        right = jnp.where(pos_in_seq + s < L, shifted, eye)             # clamp at block end
        X = _bmm_lanes(X, right)
        s *= 2

    final = jnp.concatenate([X[:, :, b * L:b * L + 1] for b in range(B)],
                            axis=2)                                     # (m, m, B)
    flat_t = final.reshape(m * m, B)                                    # (m*m, B)

    # ---- 4. Final projection + bias + ReLU. --------------------------------
    y = lax.dot_general(flat_t, wpt_ref[...], (((0,), (0,)), ((), ())),
                        preferred_element_type=jnp.float32)             # (B, out)
    out_ref[...] = jnp.maximum(y + bp_ref[...], 0.0)


def prepare_params(w1, w2, wp, bp):
    """One-time parameter prep (kept OFF the per-call path): transpose + cast,
    and fold the 2^-EXPM_SQUARINGS expm pre-scale into the l2 weight.

    w1: (H, G)     l1.weight   -> (G, H)
    w2: (m*m, H)   l2.weight   -> (H, m*m) * 2^-EXPM_SQUARINGS
    wp: (out, m*m) proj.weight -> (m*m, out)
    bp: (out,)     proj.bias   -> (1, out)
    """
    scale = 1.0 / float(2 ** EXPM_SQUARINGS)
    return (jnp.asarray(w1, jnp.float32).T,
            jnp.asarray(w2, jnp.float32).T * scale,
            jnp.asarray(wp, jnp.float32).T,
            jnp.asarray(bp, jnp.float32).reshape(1, -1))


def matrixnet_forward(word_enc, params):
    """word_enc: (B, L, G) float32; params: output of prepare_params()."""
    w1t, w2t, wpt, bp2 = params
    B, L, G = word_enc.shape
    N = B * L
    H = w1t.shape[1]
    m2 = MATRIX_SIZE * MATRIX_SIZE
    out_dim = wpt.shape[1]

    # Free metadata reshape in HBM so the kernel never relayouts the input.
    flat_enc = word_enc.reshape(N, G)

    # ~11 dependent bmms (4 PS + 4 squarings + 3 scan) + 3 tiny matmuls.
    cost = pl.CostEstimate(
        flops=2 * (N * G * H + N * H * m2
                   + 11 * MATRIX_SIZE ** 3 * N + B * m2 * out_dim),
        transcendentals=0,
        bytes_accessed=4 * (N * G + G * H + H * m2 + m2 * out_dim
                            + out_dim + B * out_dim),
    )

    # Gridless, fully VMEM-resident: total data is a few KB on v5e/v6e/v7x.
    # TODO(synk): if B*L ever grows to >=256, add a grid over the N axis with
    # dimension_semantics=("parallel",) so v7x's two TensorCores split it.
    return pl.pallas_call(
        functools.partial(matrixnet_kernel, B=B, L=L),
        out_shape=jax.ShapeDtypeStruct((B, out_dim), jnp.float32),
        in_specs=[pl.BlockSpec(memory_space=pltpu.MemorySpace.VMEM)] * 5,
        out_specs=pl.BlockSpec(memory_space=pltpu.MemorySpace.VMEM),
        cost_estimate=cost,
    )(flat_enc, w1t, w2t, wpt, bp2)


# ----------------------------- reference & demo -----------------------------

def _matrixnet_reference(word_enc, w1, w2, wp, bp):
    """Pure-JAX reference mirroring the PyTorch module, using a Pade expm
    (jax.scipy.linalg.expm ~ torch.matrix_exp).  The torch skip-all-zero
    branch is a mathematical no-op since l1/l2 are bias-free (expm(0) == I)."""
    B, L, G = word_enc.shape
    m = MATRIX_SIZE
    x = word_enc.reshape(B * L, G)
    h = jnp.maximum(x @ w1.T, 0.0)
    a = (h @ w2.T).reshape(B * L, m, m)
    mats = jax.vmap(_scipy_expm)(a).reshape(B, L, m, m)
    prod = jnp.broadcast_to(jnp.eye(m, dtype=jnp.float32), (B, m, m))
    for i in range(L):
        prod = jnp.einsum("bij,bjk->bik", prod, mats[:, i])
    flat = prod.reshape(B, m * m)
    return jnp.maximum(flat @ wp.T + bp[None, :], 0.0)


def _uniform_init(key, shape, fan_in):
    bound = 1.0 / jnp.sqrt(jnp.float32(fan_in))
    return jax.random.uniform(key, shape, jnp.float32, -bound, bound)


if __name__ == "__main__":
    B, L = 2, 8
    num_generators = 4
    hidden_dim = 32
    matrix_size = MATRIX_SIZE
    out_dim = 32

    key = jax.random.PRNGKey(0)
    k_we, k_w1, k_w2, k_wp, k_bp = jax.random.split(key, 5)

    # Parameters in PyTorch nn.Linear layout (uniform, Linear-like bounds).
    w1 = _uniform_init(k_w1, (hidden_dim, num_generators), num_generators)
    w2 = _uniform_init(k_w2, (matrix_size * matrix_size, hidden_dim), hidden_dim)
    wp = _uniform_init(k_wp, (out_dim, matrix_size * matrix_size),
                       matrix_size * matrix_size)
    bp = _uniform_init(k_bp, (out_dim,), matrix_size * matrix_size)

    # Input word encodings; zero one whole position to exercise the torch
    # "skip all-zero slice" branch (expm(0) == I inside the kernel).
    word_enc = 0.2 * jax.random.normal(k_we, (B, L, num_generators), jnp.float32)
    word_enc = word_enc.at[:, 3, :].set(0.0)

    params = prepare_params(w1, w2, wp, bp)       # one-time, off the hot path

    out = matrixnet_forward(word_enc, params)
    out = jax.block_until_ready(out)
    assert out.shape == (B, out_dim) and out.dtype == jnp.float32

    ref = _matrixnet_reference(word_enc, w1, w2, wp, bp)
    max_err = float(jnp.max(jnp.abs(out - ref)))
    assert max_err < 1e-4, f"kernel vs reference mismatch: max_err={max_err}"

    print("KERNEL_OK")
</pallas_src>

<mosaic_0001>
module attributes {stable_mosaic.version = 11 : i64} {
  func.func @matrixnet_kernel(%arg0: memref<16x4xf32, #tpu.memory_space<vmem>>, %arg1: memref<4x32xf32, #tpu.memory_space<vmem>>, %arg2: memref<32x16xf32, #tpu.memory_space<vmem>>, %arg3: memref<16x32xf32, #tpu.memory_space<vmem>>, %arg4: memref<1x32xf32, #tpu.memory_space<vmem>>, %arg5: memref<2x32xf32, #tpu.memory_space<vmem>>) attributes {dimension_semantics = [], scalar_prefetch = 0 : i64, scratch_operands = 0 : i64, tpu.core_type = #tpu.core_type<tc>} {
    %c0 = arith.constant 0 : index
    %c0_0 = arith.constant 0 : index
    %0 = vector.load %arg0[%c0, %c0_0] : memref<16x4xf32, #tpu.memory_space<vmem>>, vector<16x4xf32>
    %c0_1 = arith.constant 0 : index
    %c0_2 = arith.constant 0 : index
    %1 = vector.load %arg1[%c0_1, %c0_2] : memref<4x32xf32, #tpu.memory_space<vmem>>, vector<4x32xf32>
    %cst = arith.constant dense<0.000000e+00> : vector<16x32xf32>
    %2 = tpu.matmul %0, %1, %cst {dimension_numbers = #tpu.dot_dimension_numbers<[1], [0], [0], [1], [0, 0, 1, 1], [], []>} : vector<16x4xf32>, vector<4x32xf32>, vector<16x32xf32> -> vector<16x32xf32>
    %cst_3 = arith.constant 0.000000e+00 : f32
    %3 = vector.broadcast %cst_3 : f32 to vector<16x32xf32>
    %4 = arith.maximumf %2, %3 : vector<16x32xf32>
    %c0_4 = arith.constant 0 : index
    %c0_5 = arith.constant 0 : index
    %5 = vector.load %arg2[%c0_4, %c0_5] : memref<32x16xf32, #tpu.memory_space<vmem>>, vector<32x16xf32>
    %cst_6 = arith.constant dense<0.000000e+00> : vector<16x16xf32>
    %6 = tpu.matmul %5, %4, %cst_6 {dimension_numbers = #tpu.dot_dimension_numbers<[0], [1], [1], [0], [0, 1, 1, 0], [], []>} : vector<32x16xf32>, vector<16x32xf32>, vector<16x16xf32> -> vector<16x16xf32>
    %7 = vector.shape_cast %6 : vector<16x16xf32> to vector<4x4x16xf32>
    %8 = tpu.iota {dimensions = array<i32: 0>} : vector<4x4x16xi32>
    %9 = tpu.iota {dimensions = array<i32: 1>} : vector<4x4x16xi32>
    %10 = arith.cmpi eq, %8, %9 : vector<4x4x16xi32>
    %cst_7 = arith.constant 1.000000e+00 : f32
    %cst_8 = arith.constant 0.000000e+00 : f32
    %11 = vector.broadcast %cst_7 : f32 to vector<4x4x16xf32>
    %12 = vector.broadcast %cst_8 : f32 to vector<4x4x16xf32>
    %13 = arith.select %10, %11, %12 : vector<4x4x16xi1>, vector<4x4x16xf32>
    %14 = vector.shape_cast %7 : vector<4x4x16xf32> to vector<4x4x1x16xf32>
    %15 = vector.shape_cast %7 : vector<4x4x16xf32> to vector<1x4x4x16xf32>
    %16 = vector.broadcast %14 : vector<4x4x1x16xf32> to vector<4x4x4x16xf32>
    %17 = vector.broadcast %15 : vector<1x4x4x16xf32> to vector<4x4x4x16xf32>
    %18 = arith.mulf %16, %17 : vector<4x4x4x16xf32>
    %cst_9 = arith.constant dense<0.000000e+00> : vector<4x4x16xf32>
    %19 = vector.multi_reduction <add>, %18, %cst_9 [1] : vector<4x4x4x16xf32> to vector<4x4x16xf32>
    %20 = vector.shape_cast %19 : vector<4x4x16xf32> to vector<4x4x1x16xf32>
    %21 = vector.shape_cast %7 : vector<4x4x16xf32> to vector<1x4x4x16xf32>
    %22 = vector.broadcast %20 : vector<4x4x1x16xf32> to vector<4x4x4x16xf32>
    %23 = vector.broadcast %21 : vector<1x4x4x16xf32> to vector<4x4x4x16xf32>
    %24 = arith.mulf %22, %23 : vector<4x4x4x16xf32>
    %cst_10 = arith.constant dense<0.000000e+00> : vector<4x4x16xf32>
    %25 = vector.multi_reduction <add>, %24, %cst_10 [1] : vector<4x4x4x16xf32> to vector<4x4x16xf32>
    %26 = vector.shape_cast %19 : vector<4x4x16xf32> to vector<4x4x1x16xf32>
    %27 = vector.shape_cast %19 : vector<4x4x16xf32> to vector<1x4x4x16xf32>
    %28 = vector.broadcast %26 : vector<4x4x1x16xf32> to vector<4x4x4x16xf32>
    %29 = vector.broadcast %27 : vector<1x4x4x16xf32> to vector<4x4x4x16xf32>
    %30 = arith.mulf %28, %29 : vector<4x4x4x16xf32>
    %cst_11 = arith.constant dense<0.000000e+00> : vector<4x4x16xf32>
    %31 = vector.multi_reduction <add>, %30, %cst_11 [1] : vector<4x4x4x16xf32> to vector<4x4x16xf32>
    %32 = arith.addf %13, %7 : vector<4x4x16xf32>
    %cst_12 = arith.constant 5.000000e-01 : f32
    %33 = vector.broadcast %cst_12 : f32 to vector<4x4x16xf32>
    %34 = arith.mulf %33, %19 : vector<4x4x16xf32>
    %35 = arith.addf %32, %34 : vector<4x4x16xf32>
    %cst_13 = arith.constant 0.166666672 : f32
    %36 = vector.broadcast %cst_13 : f32 to vector<4x4x16xf32>
    %37 = arith.mulf %36, %25 : vector<4x4x16xf32>
    %38 = arith.addf %35, %37 : vector<4x4x16xf32>
    %cst_14 = arith.constant 0.0416666679 : f32
    %39 = vector.broadcast %cst_14 : f32 to vector<4x4x16xf32>
    %40 = arith.mulf %39, %13 : vector<4x4x16xf32>
    %cst_15 = arith.constant 0.00833333377 : f32
    %41 = vector.broadcast %cst_15 : f32 to vector<4x4x16xf32>
    %42 = arith.mulf %41, %7 : vector<4x4x16xf32>
    %43 = arith.addf %40, %42 : vector<4x4x16xf32>
    %cst_16 = arith.constant 0.00138888892 : f32
    %44 = vector.broadcast %cst_16 : f32 to vector<4x4x16xf32>
    %45 = arith.mulf %44, %19 : vector<4x4x16xf32>
    %46 = arith.addf %43, %45 : vector<4x4x16xf32>
    %cst_17 = arith.constant 1.98412701E-4 : f32
    %47 = vector.broadcast %cst_17 : f32 to vector<4x4x16xf32>
    %48 = arith.mulf %47, %25 : vector<4x4x16xf32>
    %49 = arith.addf %46, %48 : vector<4x4x16xf32>
    %cst_18 = arith.constant 2.48015876E-5 : f32
    %50 = vector.broadcast %cst_18 : f32 to vector<4x4x16xf32>
    %51 = arith.mulf %50, %31 : vector<4x4x16xf32>
    %52 = arith.addf %49, %51 : vector<4x4x16xf32>
    %53 = vector.shape_cast %31 : vector<4x4x16xf32> to vector<4x4x1x16xf32>
    %54 = vector.shape_cast %52 : vector<4x4x16xf32> to vector<1x4x4x16xf32>
    %55 = vector.broadcast %53 : vector<4x4x1x16xf32> to vector<4x4x4x16xf32>
    %56 = vector.broadcast %54 : vector<1x4x4x16xf32> to vector<4x4x4x16xf32>
    %57 = arith.mulf %55, %56 : vector<4x4x4x16xf32>
    %cst_19 = arith.constant dense<0.000000e+00> : vector<4x4x16xf32>
    %58 = vector.multi_reduction <add>, %57, %cst_19 [1] : vector<4x4x4x16xf32> to vector<4x4x16xf32>
    %59 = arith.addf %38, %58 : vector<4x4x16xf32>
    %60 = vector.shape_cast %59 : vector<4x4x16xf32> to vector<4x4x1x16xf32>
    %61 = vector.shape_cast %59 : vector<4x4x16xf32> to vector<1x4x4x16xf32>
    %62 = vector.broadcast %60 : vector<4x4x1x16xf32> to vector<4x4x4x16xf32>
    %63 = vector.broadcast %61 : vector<1x4x4x16xf32> to vector<4x4x4x16xf32>
    %64 = arith.mulf %62, %63 : vector<4x4x4x16xf32>
    %cst_20 = arith.constant dense<0.000000e+00> : vector<4x4x16xf32>
    %65 = vector.multi_reduction <add>, %64, %cst_20 [1] : vector<4x4x4x16xf32> to vector<4x4x16xf32>
    %66 = vector.shape_cast %65 : vector<4x4x16xf32> to vector<4x4x1x16xf32>
    %67 = vector.shape_cast %65 : vector<4x4x16xf32> to vector<1x4x4x16xf32>
    %68 = vector.broadcast %66 : vector<4x4x1x16xf32> to vector<4x4x4x16xf32>
    %69 = vector.broadcast %67 : vector<1x4x4x16xf32> to vector<4x4x4x16xf32>
    %70 = arith.mulf %68, %69 : vector<4x4x4x16xf32>
    %cst_21 = arith.constant dense<0.000000e+00> : vector<4x4x16xf32>
    %71 = vector.multi_reduction <add>, %70, %cst_21 [1] : vector<4x4x4x16xf32> to vector<4x4x16xf32>
    %72 = vector.shape_cast %71 : vector<4x4x16xf32> to vector<4x4x1x16xf32>
    %73 = vector.shape_cast %71 : vector<4x4x16xf32> to vector<1x4x4x16xf32>
    %74 = vector.broadcast %72 : vector<4x4x1x16xf32> to vector<4x4x4x16xf32>
    %75 = vector.broadcast %73 : vector<1x4x4x16xf32> to vector<4x4x4x16xf32>
    %76 = arith.mulf %74, %75 : vector<4x4x4x16xf32>
    %cst_22 = arith.constant dense<0.000000e+00> : vector<4x4x16xf32>
    %77 = vector.multi_reduction <add>, %76, %cst_22 [1] : vector<4x4x4x16xf32> to vector<4x4x16xf32>
    %78 = vector.shape_cast %77 : vector<4x4x16xf32> to vector<4x4x1x16xf32>
    %79 = vector.shape_cast %77 : vector<4x4x16xf32> to vector<1x4x4x16xf32>
    %80 = vector.broadcast %78 : vector<4x4x1x16xf32> to vector<4x4x4x16xf32>
    %81 = vector.broadcast %79 : vector<1x4x4x16xf32> to vector<4x4x4x16xf32>
    %82 = arith.mulf %80, %81 : vector<4x4x4x16xf32>
    %cst_23 = arith.constant dense<0.000000e+00> : vector<4x4x16xf32>
    %83 = vector.multi_reduction <add>, %82, %cst_23 [1] : vector<4x4x4x16xf32> to vector<4x4x16xf32>
    %84 = tpu.iota {dimensions = array<i32: 2>} : vector<4x4x16xi32>
    %c8_i32 = arith.constant 8 : i32
    %c0_i32 = arith.constant 0 : i32
    %85 = arith.cmpi eq, %c8_i32, %c0_i32 : i32
    %c1_i32 = arith.constant 1 : i32
    %86 = arith.select %85, %c1_i32, %c8_i32 : i32
    %87 = vector.broadcast %86 : i32 to vector<4x4x16xi32>
    %88 = arith.remsi %84, %87 : vector<4x4x16xi32>
    %c0_i32_24 = arith.constant 0 : i32
    %89 = vector.broadcast %c0_i32_24 : i32 to vector<4x4x16xi32>
    %90 = arith.cmpi ne, %88, %89 : vector<4x4x16xi32>
    %c0_i32_25 = arith.constant 0 : i32
    %91 = vector.broadcast %c0_i32_25 : i32 to vector<4x4x16xi32>
    %92 = arith.cmpi slt, %88, %91 : vector<4x4x16xi32>
    %c0_i32_26 = arith.constant 0 : i32
    %93 = arith.cmpi slt, %86, %c0_i32_26 : i32
    %94 = vector.broadcast %93 : i1 to vector<4x4x16xi1>
    %95 = vector.broadcast %94 : vector<4x4x16xi1> to vector<4x4x16xi1>
    %96 = arith.xori %92, %95 : vector<4x4x16xi1>
    %97 = arith.andi %96, %90 : vector<4x4x16xi1>
    %98 = vector.broadcast %86 : i32 to vector<4x4x16xi32>
    %99 = arith.addi %88, %98 : vector<4x4x16xi32>
    %100 = arith.select %97, %99, %88 : vector<4x4x16xi1>, vector<4x4x16xi32>
    %101 = vector.extract_strided_slice %83 {offsets = [0, 0, 1], sizes = [4, 4, 15], strides = [1, 1, 1]} : vector<4x4x16xf32> to vector<4x4x15xf32>
    %102 = vector.extract_strided_slice %83 {offsets = [0, 0, 0], sizes = [4, 4, 1], strides = [1, 1, 1]} : vector<4x4x16xf32> to vector<4x4x1xf32>
    %103 = tpu.concatenate %101, %102 in 2 : vector<4x4x15xf32>, vector<4x4x1xf32> -> vector<4x4x16xf32>
    %c1_i32_27 = arith.constant 1 : i32
    %104 = vector.broadcast %c1_i32_27 : i32 to vector<4x4x16xi32>
    %105 = arith.addi %100, %104 : vector<4x4x16xi32>
    %c8_i32_28 = arith.constant 8 : i32
    %106 = vector.broadcast %c8_i32_28 : i32 to vector<4x4x16xi32>
    %107 = arith.cmpi slt, %105, %106 : vector<4x4x16xi32>
    %108 = arith.select %107, %103, %13 : vector<4x4x16xi1>, vector<4x4x16xf32>
    %109 = vector.shape_cast %83 : vector<4x4x16xf32> to vector<4x4x1x16xf32>
    %110 = vector.shape_cast %108 : vector<4x4x16xf32> to vector<1x4x4x16xf32>
    %111 = vector.broadcast %109 : vector<4x4x1x16xf32> to vector<4x4x4x16xf32>
    %112 = vector.broadcast %110 : vector<1x4x4x16xf32> to vector<4x4x4x16xf32>
    %113 = arith.mulf %111, %112 : vector<4x4x4x16xf32>
    %cst_29 = arith.constant dense<0.000000e+00> : vector<4x4x16xf32>
    %114 = vector.multi_reduction <add>, %113, %cst_29 [1] : vector<4x4x4x16xf32> to vector<4x4x16xf32>
    %115 = vector.extract_strided_slice %114 {offsets = [0, 0, 2], sizes = [4, 4, 14], strides = [1, 1, 1]} : vector<4x4x16xf32> to vector<4x4x14xf32>
    %116 = vector.extract_strided_slice %114 {offsets = [0, 0, 0], sizes = [4, 4, 2], strides = [1, 1, 1]} : vector<4x4x16xf32> to vector<4x4x2xf32>
    %117 = tpu.concatenate %115, %116 in 2 : vector<4x4x14xf32>, vector<4x4x2xf32> -> vector<4x4x16xf32>
    %c2_i32 = arith.constant 2 : i32
    %118 = vector.broadcast %c2_i32 : i32 to vector<4x4x16xi32>
    %119 = arith.addi %100, %118 : vector<4x4x16xi32>
    %c8_i32_30 = arith.constant 8 : i32
    %120 = vector.broadcast %c8_i32_30 : i32 to vector<4x4x16xi32>
    %121 = arith.cmpi slt, %119, %120 : vector<4x4x16xi32>
    %122 = arith.select %121, %117, %13 : vector<4x4x16xi1>, vector<4x4x16xf32>
    %123 = vector.shape_cast %114 : vector<4x4x16xf32> to vector<4x4x1x16xf32>
    %124 = vector.shape_cast %122 : vector<4x4x16xf32> to vector<1x4x4x16xf32>
    %125 = vector.broadcast %123 : vector<4x4x1x16xf32> to vector<4x4x4x16xf32>
    %126 = vector.broadcast %124 : vector<1x4x4x16xf32> to vector<4x4x4x16xf32>
    %127 = arith.mulf %125, %126 : vector<4x4x4x16xf32>
    %cst_31 = arith.constant dense<0.000000e+00> : vector<4x4x16xf32>
    %128 = vector.multi_reduction <add>, %127, %cst_31 [1] : vector<4x4x4x16xf32> to vector<4x4x16xf32>
    %129 = vector.extract_strided_slice %128 {offsets = [0, 0, 4], sizes = [4, 4, 12], strides = [1, 1, 1]} : vector<4x4x16xf32> to vector<4x4x12xf32>
    %130 = vector.extract_strided_slice %128 {offsets = [0, 0, 0], sizes = [4, 4, 4], strides = [1, 1, 1]} : vector<4x4x16xf32> to vector<4x4x4xf32>
    %131 = tpu.concatenate %129, %130 in 2 : vector<4x4x12xf32>, vector<4x4x4xf32> -> vector<4x4x16xf32>
    %c4_i32 = arith.constant 4 : i32
    %132 = vector.broadcast %c4_i32 : i32 to vector<4x4x16xi32>
    %133 = arith.addi %100, %132 : vector<4x4x16xi32>
    %c8_i32_32 = arith.constant 8 : i32
    %134 = vector.broadcast %c8_i32_32 : i32 to vector<4x4x16xi32>
    %135 = arith.cmpi slt, %133, %134 : vector<4x4x16xi32>
    %136 = arith.select %135, %131, %13 : vector<4x4x16xi1>, vector<4x4x16xf32>
    %137 = vector.shape_cast %128 : vector<4x4x16xf32> to vector<4x4x1x16xf32>
    %138 = vector.shape_cast %136 : vector<4x4x16xf32> to vector<1x4x4x16xf32>
    %139 = vector.broadcast %137 : vector<4x4x1x16xf32> to vector<4x4x4x16xf32>
    %140 = vector.broadcast %138 : vector<1x4x4x16xf32> to vector<4x4x4x16xf32>
    %141 = arith.mulf %139, %140 : vector<4x4x4x16xf32>
    %cst_33 = arith.constant dense<0.000000e+00> : vector<4x4x16xf32>
    %142 = vector.multi_reduction <add>, %141, %cst_33 [1] : vector<4x4x4x16xf32> to vector<4x4x16xf32>
    %143 = vector.extract_strided_slice %142 {offsets = [0, 0, 0], sizes = [4, 4, 1], strides = [1, 1, 1]} : vector<4x4x16xf32> to vector<4x4x1xf32>
    %144 = vector.extract_strided_slice %142 {offsets = [0, 0, 8], sizes = [4, 4, 1], strides = [1, 1, 1]} : vector<4x4x16xf32> to vector<4x4x1xf32>
    %145 = tpu.concatenate %143, %144 in 2 : vector<4x4x1xf32>, vector<4x4x1xf32> -> vector<4x4x2xf32>
    %146 = vector.shape_cast %145 : vector<4x4x2xf32> to vector<16x2xf32>
    %c0_34 = arith.constant 0 : index
    %c0_35 = arith.constant 0 : index
    %147 = vector.load %arg3[%c0_34, %c0_35] : memref<16x32xf32, #tpu.memory_space<vmem>>, vector<16x32xf32>
    %cst_36 = arith.constant dense<0.000000e+00> : vector<2x32xf32>
    %148 = tpu.matmul %146, %147, %cst_36 {dimension_numbers = #tpu.dot_dimension_numbers<[0], [0], [1], [1], [0, 1, 1, 1], [], []>} : vector<16x2xf32>, vector<16x32xf32>, vector<2x32xf32> -> vector<2x32xf32>
    %c0_37 = arith.constant 0 : index
    %c0_38 = arith.constant 0 : index
    %149 = vector.load %arg4[%c0_37, %c0_38] : memref<1x32xf32, #tpu.memory_space<vmem>>, vector<1x32xf32>
    %150 = vector.broadcast %149 : vector<1x32xf32> to vector<2x32xf32>
    %151 = arith.addf %148, %150 : vector<2x32xf32>
    %cst_39 = arith.constant 0.000000e+00 : f32
    %152 = vector.broadcast %cst_39 : f32 to vector<2x32xf32>
    %153 = arith.maximumf %151, %152 : vector<2x32xf32>
    %c0_40 = arith.constant 0 : index
    %c0_41 = arith.constant 0 : index
    %154 = vector.load %arg5[%c0_40, %c0_41] : memref<2x32xf32, #tpu.memory_space<vmem>>, vector<2x32xf32>
    tpu.vector_store %arg5[%c0_40, %c0_41], %153 {strides = array<i32>} : memref<2x32xf32, #tpu.memory_space<vmem>>, vector<2x32xf32>,
    return
  }
}

</mosaic_0001>

<llo_original>
// kernel: tpu_custom_call.1
$region0: #{tpu_custom_call.1}
  #allocation0 [shape = 'u32[]', space=smem, size = 0x4, offset = 0x4, fixed_abs, tag = 'smem constant byte address 0x4 - core index']
  #allocation1 [shape = 'u32[144,128]{1,0:T(1,128)}', space=vmem, size = 0x12000, scoped, tag = 'internal scratch']
  %s0 = inlined_call_operand.vmem [shape: f32[16,4], index: 0, kind: input, shape index: {}]
  %s1 = inlined_call_operand.vmem [shape: f32[4,32], index: 1, kind: input, shape index: {}]
  %s2 = inlined_call_operand.vmem [shape: f32[32,16], index: 2, kind: input, shape index: {}]
  %s3 = inlined_call_operand.vmem [shape: f32[16,32], index: 3, kind: input, shape index: {}]
  %s4 = inlined_call_operand.vmem [shape: f32[1,32], index: 4, kind: input, shape index: {}]
  %s5 = inlined_call_operand.hbm [shape: f32[2,32], index: 5, kind: output, shape index: {}]
  %s6 = sld [smem:[#allocation0]]
  $region30: #{tpu_custom_call.1} parent=0
    _
  %s8 = ssub.s32 1, %s6
  %s9 = scalar_select 0, %s8, %s6
  $region1: #{tpu_custom_call.1} parent=0
    #allocation2 [shape = 'u8[1024]{0}', space=vmem, size = 0x400, scoped, tag = 'output window, operand 0, single buffered']
    #allocation3 [shape = 's32[1]{0}', space=sflag, size = 0x4, scoped, tag = 'scoped memory for tpu_custom_call.1']
    %10 = vsyncpa [#allocation3], 0
    // Predicated region
    $region2: #{tpu_custom_call.1} parent=1 // pred_check
      _
    $region3: #{tpu_custom_call.1} parent=1 // pred_check_branch
      %12 = sbr.rel (0) target = $region5
    $region4: #{tpu_custom_call.1} parent=1 // pred_region
      _
    $region5: #{tpu_custom_call.1} parent=1 // pred_fallthru
      _
    // Predicated region
    $region6: #{tpu_custom_call.1} parent=1 // pred_check
      _
    $region7: #{tpu_custom_call.1} parent=1 // pred_check_branch
      %14 = sbr.rel (0) target = $region9
    $region8: #{tpu_custom_call.1} parent=1 // pred_region
      _
    $region9: #{tpu_custom_call.1} parent=1 // pred_fallthru
      _
    // Predicated region
    $region10: #{tpu_custom_call.1} parent=1 // pred_check
      _
    $region11: #{tpu_custom_call.1} parent=1 // pred_check_branch
      %16 = sbr.rel (0) target = $region13
    $region12: #{tpu_custom_call.1} parent=1 // pred_region
      _
    $region13: #{tpu_custom_call.1} parent=1 // pred_fallthru
      _
    // Predicated region
    $region14: #{tpu_custom_call.1} parent=1 // pred_check
      _
    $region15: #{tpu_custom_call.1} parent=1 // pred_check_branch
      %18 = sbr.rel (0) target = $region17
    $region16: #{tpu_custom_call.1} parent=1 // pred_region
      _
    $region17: #{tpu_custom_call.1} parent=1 // pred_fallthru
      _
    // Predicated region
    $region18: #{tpu_custom_call.1} parent=1 // pred_check
      _
    $region19: #{tpu_custom_call.1} parent=1 // pred_check_branch
      %20 = sbr.rel (0) target = $region21
    $region20: #{tpu_custom_call.1} parent=1 // pred_region
      _
    $region21: #{tpu_custom_call.1} parent=1 // pred_fallthru
      _
    %v21 = vld [vmem:[%s0] sm:$0xff]
    %v22 = vld [vmem:[%s0 + $0x8] sm:$0xff]
    %v23 = vld [vmem:[%s1] sm:$0xf]
    %vm24 = vcmask 31744
    %v26 = vsel %vm24, %v21, 0
    %v29 = vsel %vm24, %v22, 0
    %vm31 = vcmask 1043456
    %v33 = vsel %vm31, %v23, 0
    %35 = vmatprep.subr.mxu0 0.0
    %36 = vmatpush1.msra.mxu0 0.0
    %37 = vmatprep.subr.mxu0 0.0
    %38 = vmatpush1.msra.mxu0 0.0
    %39 = vmatprep.subr.mxu0 0.0
    %40 = vmatpush1.msra.mxu0 0.0
    %41 = vmatprep.subr.mxu0 0.0
    %42 = vmatpush1.msra.mxu0 0.0
    %43 = vmatprep.subr.mxu0 0.0
    %44 = vmatpush1.msra.mxu0 0.0
    %45 = vmatprep.subr.mxu0 0.0
    %46 = vmatpush1.msra.mxu0 0.0
    %47 = vmatprep.subr.mxu0 0.0
    %48 = vmatpush1.msra.mxu0 0.0
    %49 = vmatprep.subr.mxu0 0.0
    %50 = vmatpush1.msra.mxu0 0.0
    %51 = vmatprep.subr.mxu0 0.0
    %52 = vmatpush1.msra.mxu0 0.0
    %53 = vmatprep.subr.mxu0 0.0
    %54 = vmatpush1.msra.mxu0 0.0
    %55 = vmatprep.subr.mxu0 0.0
    %56 = vmatpush1.msra.mxu0 0.0
    %57 = vmatprep.subr.mxu0 0.0
    %58 = vmatpush1.msra.mxu0 0.0
    %59 = vmatprep.subr.mxu0 0.0
    %60 = vmatpush1.msra.mxu0 0.0
    %61 = vmatprep.subr.mxu0 0.0
    %62 = vmatpush1.msra.mxu0 0.0
    %63 = vmatprep.subr.mxu0 0.0
    %64 = vmatpush1.msra.mxu0 0.0
    %65 = vmatprep.subr.mxu0 0.0
    %66 = vmatpush1.msra.mxu0 %v33
    %67 = vmatprep.subr.mxu0 0.0
    %68 = vmatpush2.msra.mxu0 0.0
    %69 = vmatprep.subr.mxu0 0.0
    %70 = vmatpush2.msra.mxu0 0.0
    %71 = vmatprep.subr.mxu0 0.0
    %72 = vmatpush2.msra.mxu0 0.0
    %73 = vmatprep.subr.mxu0 0.0
    %74 = vmatpush2.msra.mxu0 0.0
    %75 = vmatprep.subr.mxu0 0.0
    %76 = vmatpush2.msra.mxu0 0.0
    %77 = vmatprep.subr.mxu0 0.0
    %78 = vmatpush2.msra.mxu0 0.0
    %79 = vmatprep.subr.mxu0 0.0
    %80 = vmatpush2.msra.mxu0 0.0
    %81 = vmatprep.subr.mxu0 0.0
    %82 = vmatpush2.msra.mxu0 0.0
    %83 = vmatprep.subr.mxu0 0.0
    %84 = vmatpush2.msra.mxu0 0.0
    %85 = vmatprep.subr.mxu0 0.0
    %86 = vmatpush2.msra.mxu0 0.0
    %87 = vmatprep.subr.mxu0 0.0
    %88 = vmatpush2.msra.mxu0 0.0
    %89 = vmatprep.subr.mxu0 0.0
    %90 = vmatpush2.msra.mxu0 0.0
    %91 = vmatprep.subr.mxu0 0.0
    %92 = vmatpush2.msra.mxu0 0.0
    %93 = vmatprep.subr.mxu0 0.0
    %94 = vmatpush2.msra.mxu0 0.0
    %95 = vmatprep.subr.mxu0 0.0
    %96 = vmatpush2.msra.mxu0 0.0
    %97 = vmatprep.subr.mxu0 0.0
    %98 = vmatpush2.msra.mxu0 0.0
    %99 = vmatprep.mubr.f32.mxu0 0.0
    %100 = vmatmul.mubr.f32.gmra.mxu0 %v26
    %v101 = vpop.f32.mrf.mxu0
    %v102 = vadd.f32 0.0, %v101
    %v103 = vpop.f32.mrf.mxu0
    %104 = vmatprep.mubr.f32.mxu0 0.0
    %105 = vmatmul.mubr.f32.gmra.mxu0 %v29
    %v106 = vpop.f32.mrf.mxu0
    %v107 = vadd.f32 0.0, %v106
    %v108 = vpop.f32.mrf.mxu0
    %109 = vdwg.mxu0
    %v110 = vmax.f32 %v102, 0.0
    %v111 = vmax.f32 %v107, 0.0
    %v112 = vld [vmem:[%s2] sm:$0xff]
    %v113 = vld [vmem:[%s2 + $0x8] sm:$0xff]
    %v114 = vld [vmem:[%s2 + $0x10] sm:$0xff]
    %v115 = vld [vmem:[%s2 + $0x18] sm:$0xff]
    %116 = vxpose.xlu0.b32.start [1/16] %v112, 128
    %117 = vxpose.xlu0.b32.cont [2/16] %v113, 128
    %118 = vxpose.xlu0.b32.cont [3/16] %v114, 128
    %119 = vxpose.xlu0.b32.cont [4/16] %v115, 128
    %120 = vxpose.xlu0.b32.cont [5/16] 0.0, 128
    %121 = vxpose.xlu0.b32.cont [6/16] 0.0, 128
    %122 = vxpose.xlu0.b32.cont [7/16] 0.0, 128
    %123 = vxpose.xlu0.b32.cont [8/16] 0.0, 128
    %124 = vxpose.xlu0.b32.cont [9/16] 0.0, 128
    %125 = vxpose.xlu0.b32.cont [10/16] 0.0, 128
    %126 = vxpose.xlu0.b32.cont [11/16] 0.0, 128
    %127 = vxpose.xlu0.b32.cont [12/16] 0.0, 128
    %128 = vxpose.xlu0.b32.cont [13/16] 0.0, 128
    %129 = vxpose.xlu0.b32.cont [14/16] 0.0, 128
    %130 = vxpose.xlu0.b32.cont [15/16] 0.0, 128
    %131 = vxpose.xlu0.b32.end [16/16] 0.0, 128
    %v132 = vpop.trf.xlu0
    %v133 = vpop.trf.xlu0
    %v134 = vpop.trf.xlu0
    %v135 = vpop.trf.xlu0
    %v136 = vpop.trf.xlu0
    %v137 = vpop.trf.xlu0
    %v138 = vpop.trf.xlu0
    %v139 = vpop.trf.xlu0
    %v140 = vpop.trf.xlu0
    %v141 = vpop.trf.xlu0
    %v142 = vpop.trf.xlu0
    %v143 = vpop.trf.xlu0
    %v144 = vpop.trf.xlu0
    %v145 = vpop.trf.xlu0
    %v146 = vpop.trf.xlu0
    %v147 = vpop.trf.xlu0
    %vm148 = vcmask 261120
    %v150 = vsel %vm148, %v132, 0
    %v153 = vsel %vm148, %v133, 0
    %v156 = vsel %vm148, %v110, 0
    %v159 = vsel %vm148, %v111, 0
    %161 = vmatprep.subr.mxu0 0.0
    %162 = vmatpush1.xpose.msra.mxu0 0.0
    %163 = vmatprep.subr.mxu0 0.0
    %164 = vmatpush1.xpose.msra.mxu0 0.0
    %165 = vmatprep.subr.mxu0 0.0
    %166 = vmatpush1.xpose.msra.mxu0 0.0
    %167 = vmatprep.subr.mxu0 0.0
    %168 = vmatpush1.xpose.msra.mxu0 0.0
    %169 = vmatprep.subr.mxu0 0.0
    %170 = vmatpush1.xpose.msra.mxu0 0.0
    %171 = vmatprep.subr.mxu0 0.0
    %172 = vmatpush1.xpose.msra.mxu0 0.0
    %173 = vmatprep.subr.mxu0 0.0
    %174 = vmatpush1.xpose.msra.mxu0 0.0
    %175 = vmatprep.subr.mxu0 0.0
    %176 = vmatpush1.xpose.msra.mxu0 0.0
    %177 = vmatprep.subr.mxu0 0.0
    %178 = vmatpush1.xpose.msra.mxu0 0.0
    %179 = vmatprep.subr.mxu0 0.0
    %180 = vmatpush1.xpose.msra.mxu0 0.0
    %181 = vmatprep.subr.mxu0 0.0
    %182 = vmatpush1.xpose.msra.mxu0 0.0
    %183 = vmatprep.subr.mxu0 0.0
    %184 = vmatpush1.xpose.msra.mxu0 0.0
    %185 = vmatprep.subr.mxu0 0.0
    %186 = vmatpush1.xpose.msra.mxu0 0.0
    %187 = vmatprep.subr.mxu0 0.0
    %188 = vmatpush1.xpose.msra.mxu0 0.0
    %189 = vmatprep.subr.mxu0 0.0
    %190 = vmatpush1.xpose.msra.mxu0 %v159
    %191 = vmatprep.subr.mxu0 0.0
    %192 = vmatpush1.xpose.msra.mxu0 %v156
    %193 = vmatprep.subr.mxu0 0.0
    %194 = vmatpush2.xpose.msra.mxu0 0.0
    %195 = vmatprep.subr.mxu0 0.0
    %196 = vmatpush2.xpose.msra.mxu0 0.0
    %197 = vmatprep.subr.mxu0 0.0
    %198 = vmatpush2.xpose.msra.mxu0 0.0
    %199 = vmatprep.subr.mxu0 0.0
    %200 = vmatpush2.xpose.msra.mxu0 0.0
    %201 = vmatprep.subr.mxu0 0.0
    %202 = vmatpush2.xpose.msra.mxu0 0.0
    %203 = vmatprep.subr.mxu0 0.0
    %204 = vmatpush2.xpose.msra.mxu0 0.0
    %205 = vmatprep.subr.mxu0 0.0
    %206 = vmatpush2.xpose.msra.mxu0 0.0
    %207 = vmatprep.subr.mxu0 0.0
    %208 = vmatpush2.xpose.msra.mxu0 0.0
    %209 = vmatprep.subr.mxu0 0.0
    %210 = vmatpush2.xpose.msra.mxu0 0.0
    %211 = vmatprep.subr.mxu0 0.0
    %212 = vmatpush2.xpose.msra.mxu0 0.0
    %213 = vmatprep.subr.mxu0 0.0
    %214 = vmatpush2.xpose.msra.mxu0 0.0
    %215 = vmatprep.subr.mxu0 0.0
    %216 = vmatpush2.xpose.msra.mxu0 0.0
    %217 = vmatprep.subr.mxu0 0.0
    %218 = vmatpush2.xpose.msra.mxu0 0.0
    %219 = vmatprep.subr.mxu0 0.0
    %220 = vmatpush2.xpose.msra.mxu0 0.0
    %221 = vmatprep.subr.mxu0 0.0
    %222 = vmatpush2.xpose.msra.mxu0 0.0
    %223 = vmatprep.subr.mxu0 0.0
    %224 = vmatpush2.xpose.msra.mxu0 0.0
    %225 = vmatprep.mubr.f32.mxu0 0.0
    %226 = vmatmul.mubr.f32.gmra.mxu0 %v150
    %v227 = vpop.f32.mrf.mxu0
    %v228 = vadd.f32 0.0, %v227
    %v229 = vpop.f32.mrf.mxu0
    %230 = vmatprep.mubr.f32.mxu0 0.0
    %231 = vmatmul.mubr.f32.gmra.mxu0 %v153
    %v232 = vpop.f32.mrf.mxu0
    %v233 = vadd.f32 0.0, %v232
    %v234 = vpop.f32.mrf.mxu0
    %235 = vdwg.mxu0
    %v238 = vcombine.high %v228, %v228
    %v239 = vcombine.high %v233, %v233
    %v242 = vlaneseq
    %v243 = vshrl.u32 %v242, 7
    %vm244 = vcmp.eq.s32.totalorder %v243, 0
    %vm245 = vcmp.eq.s32.totalorder %v243, 1
    %vm246 = vcmp.eq.s32.totalorder %v243, 2
    %vm247 = vcmp.eq.s32.totalorder %v243, 3
    %v248 = vsel %vm244, 1.0, 0.0
    %v249 = vsel %vm245, 1.0, 0.0
    %v250 = vsel %vm246, 1.0, 0.0
    %v251 = vsel %vm247, 1.0, 0.0
    %v253 = vunpack.c.l.s4 1966171168
    %v254 = vunpack.c.0.s8 %v253
    %v255 = vlaneseq
    %v256 = vshrl.u32 %v255, 7
    %v257 = vsub.s32 %v254, %v256
    %v258 = vrot.slane %v228, %v257
    %v260 = vunpack.c.l.s4 1966171168
    %v261 = vunpack.c.0.s8 %v260
    %v262 = vlaneseq
    %v263 = vshrl.u32 %v262, 7
    %v264 = vsub.s32 %v261, %v263
    %v265 = vrot.slane %v238, %v264
    %v266 = vcombine.high %v258, %v258
    %v267 = vcombine.high %v265, %v265
    %v269 = vunpack.c.l.s4 1966171168
    %v270 = vunpack.c.0.s8 %v269
    %v271 = vlaneseq
    %v272 = vshrl.u32 %v271, 7
    %v273 = vsub.s32 %v270, %v272
    %v274 = vrot.slane %v258, %v273
    %v276 = vunpack.c.l.s4 1966171168
    %v277 = vunpack.c.0.s8 %v276
    %v278 = vlaneseq
    %v279 = vshrl.u32 %v278, 7
    %v280 = vsub.s32 %v277, %v279
    %v281 = vrot.slane %v265, %v280
    %v283 = vunpack.c.l.s4 1966171168
    %v284 = vunpack.c.0.s8 %v283
    %v285 = vlaneseq
    %v286 = vshrl.u32 %v285, 7
    %v287 = vsub.s32 %v284, %v286
    %v288 = vrot.slane %v266, %v287
    %v290 = vunpack.c.l.s4 1966171168
    %v291 = vunpack.c.0.s8 %v290
    %v292 = vlaneseq
    %v293 = vshrl.u32 %v292, 7
    %v294 = vsub.s32 %v291, %v293
    %v295 = vrot.slane %v267, %v294
    %v296 = vcombine.high %v274, %v274
    %v297 = vcombine.high %v281, %v281
    %v298 = vcombine.high %v288, %v288
    %v299 = vcombine.high %v295, %v295
    %v301 = vunpack.c.l.s4 1966171168
    %v302 = vunpack.c.0.s8 %v301
    %v303 = vlaneseq
    %v304 = vshrl.u32 %v303, 7
    %v305 = vsub.s32 %v302, %v304
    %v306 = vrot.slane %v233, %v305
    %v308 = vunpack.c.l.s4 1966171168
    %v309 = vunpack.c.0.s8 %v308
    %v310 = vlaneseq
    %v311 = vshrl.u32 %v310, 7
    %v312 = vsub.s32 %v309, %v311
    %v313 = vrot.slane %v239, %v312
    %v314 = vcombine.high %v306, %v306
    %v315 = vcombine.high %v313, %v313
    %v317 = vunpack.c.l.s4 1966171168
    %v318 = vunpack.c.0.s8 %v317
    %v319 = vlaneseq
    %v320 = vshrl.u32 %v319, 7
    %v321 = vsub.s32 %v318, %v320
    %v322 = vrot.slane %v306, %v321
    %v324 = vunpack.c.l.s4 1966171168
    %v325 = vunpack.c.0.s8 %v324
    %v326 = vlaneseq
    %v327 = vshrl.u32 %v326, 7
    %v328 = vsub.s32 %v325, %v327
    %v329 = vrot.slane %v313, %v328
    %v331 = vunpack.c.l.s4 1966171168
    %v332 = vunpack.c.0.s8 %v331
    %v333 = vlaneseq
    %v334 = vshrl.u32 %v333, 7
    %v335 = vsub.s32 %v332, %v334
    %v336 = vrot.slane %v314, %v335
    %v338 = vunpack.c.l.s4 1966171168
    %v339 = vunpack.c.0.s8 %v338
    %v340 = vlaneseq
    %v341 = vshrl.u32 %v340, 7
    %v342 = vsub.s32 %v339, %v341
    %v343 = vrot.slane %v315, %v342
    %v344 = vcombine.high %v322, %v322
    %v345 = vcombine.high %v329, %v329
    %v346 = vcombine.high %v336, %v336
    %v347 = vcombine.high %v343, %v343
    %v348 = vlaneseq
    %v349 = vshrl.u32 %v348, 7
    %v350 = vsub.s32 0, %v349
    %v351 = vrot.slane %v274, %v350
    %v352 = vlaneseq
    %v353 = vshrl.u32 %v352, 7
    %v354 = vsub.s32 0, %v353
    %v355 = vrot.slane %v288, %v354
    %v356 = vlaneseq
    %v357 = vshrl.u32 %v356, 7
    %v358 = vsub.s32 0, %v357
    %v359 = vrot.slane %v296, %v358
    %v360 = vlaneseq
    %v361 = vshrl.u32 %v360, 7
    %v362 = vsub.s32 0, %v361
    %v363 = vrot.slane %v298, %v362
    %v364 = vlaneseq
    %v365 = vshrl.u32 %v364, 7
    %v366 = vsub.s32 0, %v365
    %v367 = vrot.slane %v281, %v366
    %v368 = vlaneseq
    %v369 = vshrl.u32 %v368, 7
    %v370 = vsub.s32 0, %v369
    %v371 = vrot.slane %v295, %v370
    %v372 = vlaneseq
    %v373 = vshrl.u32 %v372, 7
    %v374 = vsub.s32 0, %v373
    %v375 = vrot.slane %v297, %v374
    %v376 = vlaneseq
    %v377 = vshrl.u32 %v376, 7
    %v378 = vsub.s32 0, %v377
    %v379 = vrot.slane %v299, %v378
    %v380 = vlaneseq
    %v381 = vshrl.u32 %v380, 7
    %v382 = vsub.s32 0, %v381
    %v383 = vrot.slane %v322, %v382
    %v384 = vlaneseq
    %v385 = vshrl.u32 %v384, 7
    %v386 = vsub.s32 0, %v385
    %v387 = vrot.slane %v336, %v386
    %v388 = vlaneseq
    %v389 = vshrl.u32 %v388, 7
    %v390 = vsub.s32 0, %v389
    %v391 = vrot.slane %v344, %v390
    %v392 = vlaneseq
    %v393 = vshrl.u32 %v392, 7
    %v394 = vsub.s32 0, %v393
    %v395 = vrot.slane %v346, %v394
    %v396 = vlaneseq
    %v397 = vshrl.u32 %v396, 7
    %v398 = vsub.s32 0, %v397
    %v399 = vrot.slane %v329, %v398
    %v400 = vlaneseq
    %v401 = vshrl.u32 %v400, 7
    %v402 = vsub.s32 0, %v401
    %v403 = vrot.slane %v343, %v402
    %v404 = vlaneseq
    %v405 = vshrl.u32 %v404, 7
    %v406 = vsub.s32 0, %v405
    %v407 = vrot.slane %v345, %v406
    %v408 = vlaneseq
    %v409 = vshrl.u32 %v408, 7
    %v410 = vsub.s32 0, %v409
    %v411 = vrot.slane %v347, %v410
    %v428 = vmul.f32 %v351, %v228
    %v429 = vmul.f32 %v355, %v238
    %v430 = vmul.f32 %v359, %v233
    %v431 = vmul.f32 %v363, %v239
    %v432 = vmul.f32 %v367, %v228
    %v433 = vmul.f32 %v371, %v238
    %v434 = vmul.f32 %v375, %v233
    %v435 = vmul.f32 %v379, %v239
    %v436 = vmul.f32 %v383, %v228
    %v437 = vmul.f32 %v387, %v238
    %v438 = vmul.f32 %v391, %v233
    %v439 = vmul.f32 %v395, %v239
    %v440 = vmul.f32 %v399, %v228
    %v441 = vmul.f32 %v403, %v238
    %v442 = vmul.f32 %v407, %v233
    %v443 = vmul.f32 %v411, %v239
    %vm444 = vcmask 125952
    %v445 = vsel %vm444, %v428, 0.0
    %v446 = vsel %vm444, %v429, 0.0
    %v447 = vadd.f32 %v445, %v446
    %v448 = vsel %vm444, %v430, 0.0
    %v449 = vadd.f32 %v447, %v448
    %v450 = vsel %vm444, %v431, 0.0
    %v451 = vadd.f32 %v449, %v450
    %v452 = vsel %vm444, %v432, 0.0
    %v453 = vsel %vm444, %v433, 0.0
    %v454 = vadd.f32 %v452, %v453
    %v455 = vsel %vm444, %v434, 0.0
    %v456 = vadd.f32 %v454, %v455
    %v457 = vsel %vm444, %v435, 0.0
    %v458 = vadd.f32 %v456, %v457
    %v459 = vsel %vm444, %v436, 0.0
    %v460 = vsel %vm444, %v437, 0.0
    %v461 = vadd.f32 %v459, %v460
    %v462 = vsel %vm444, %v438, 0.0
    %v463 = vadd.f32 %v461, %v462
    %v464 = vsel %vm444, %v439, 0.0
    %v465 = vadd.f32 %v463, %v464
    %v466 = vsel %vm444, %v440, 0.0
    %v467 = vsel %vm444, %v441, 0.0
    %v468 = vadd.f32 %v466, %v467
    %v469 = vsel %vm444, %v442, 0.0
    %v470 = vadd.f32 %v468, %v469
    %v471 = vsel %vm444, %v443, 0.0
    %v472 = vadd.f32 %v470, %v471
    %v478 = vunpack.c.l.s4 1966171168
    %v479 = vunpack.c.0.s8 %v478
    %v480 = vlaneseq
    %v481 = vshrl.u32 %v480, 7
    %v482 = vsub.s32 %v479, %v481
    %v483 = vrot.slane %v451, %v482
    %v484 = vcombine.high %v483, %v483
    %v486 = vunpack.c.l.s4 1966171168
    %v487 = vunpack.c.0.s8 %v486
    %v488 = vlaneseq
    %v489 = vshrl.u32 %v488, 7
    %v490 = vsub.s32 %v487, %v489
    %v491 = vrot.slane %v483, %v490
    %v493 = vunpack.c.l.s4 1966171168
    %v494 = vunpack.c.0.s8 %v493
    %v495 = vlaneseq
    %v496 = vshrl.u32 %v495, 7
    %v497 = vsub.s32 %v494, %v496
    %v498 = vrot.slane %v484, %v497
    %v499 = vcombine.high %v491, %v491
    %v500 = vcombine.high %v498, %v498
    %v502 = vunpack.c.l.s4 1966171168
    %v503 = vunpack.c.0.s8 %v502
    %v504 = vlaneseq
    %v505 = vshrl.u32 %v504, 7
    %v506 = vsub.s32 %v503, %v505
    %v507 = vrot.slane %v458, %v506
    %v508 = vcombine.high %v507, %v507
    %v510 = vunpack.c.l.s4 1966171168
    %v511 = vunpack.c.0.s8 %v510
    %v512 = vlaneseq
    %v513 = vshrl.u32 %v512, 7
    %v514 = vsub.s32 %v511, %v513
    %v515 = vrot.slane %v507, %v514
    %v517 = vunpack.c.l.s4 1966171168
    %v518 = vunpack.c.0.s8 %v517
    %v519 = vlaneseq
    %v520 = vshrl.u32 %v519, 7
    %v521 = vsub.s32 %v518, %v520
    %v522 = vrot.slane %v508, %v521
    %v523 = vcombine.high %v515, %v515
    %v524 = vcombine.high %v522, %v522
    %v526 = vunpack.c.l.s4 1966171168
    %v527 = vunpack.c.0.s8 %v526
    %v528 = vlaneseq
    %v529 = vshrl.u32 %v528, 7
    %v530 = vsub.s32 %v527, %v529
    %v531 = vrot.slane %v465, %v530
    %v532 = vcombine.high %v531, %v531
    %v534 = vunpack.c.l.s4 1966171168
    %v535 = vunpack.c.0.s8 %v534
    %v536 = vlaneseq
    %v537 = vshrl.u32 %v536, 7
    %v538 = vsub.s32 %v535, %v537
    %v539 = vrot.slane %v531, %v538
    %v541 = vunpack.c.l.s4 1966171168
    %v542 = vunpack.c.0.s8 %v541
    %v543 = vlaneseq
    %v544 = vshrl.u32 %v543, 7
    %v545 = vsub.s32 %v542, %v544
    %v546 = vrot.slane %v532, %v545
    %v547 = vcombine.high %v539, %v539
    %v548 = vcombine.high %v546, %v546
    %v550 = vunpack.c.l.s4 1966171168
    %v551 = vunpack.c.0.s8 %v550
    %v552 = vlaneseq
    %v553 = vshrl.u32 %v552, 7
    %v554 = vsub.s32 %v551, %v553
    %v555 = vrot.slane %v472, %v554
    %v556 = vcombine.high %v555, %v555
    %v558 = vunpack.c.l.s4 1966171168
    %v559 = vunpack.c.0.s8 %v558
    %v560 = vlaneseq
    %v561 = vshrl.u32 %v560, 7
    %v562 = vsub.s32 %v559, %v561
    %v563 = vrot.slane %v555, %v562
    %v565 = vunpack.c.l.s4 1966171168
    %v566 = vunpack.c.0.s8 %v565
    %v567 = vlaneseq
    %v568 = vshrl.u32 %v567, 7
    %v569 = vsub.s32 %v566, %v568
    %v570 = vrot.slane %v556, %v569
    %v571 = vcombine.high %v563, %v563
    %v572 = vcombine.high %v570, %v570
    %v573 = vlaneseq
    %v574 = vshrl.u32 %v573, 7
    %v575 = vsub.s32 0, %v574
    %v576 = vrot.slane %v491, %v575
    %v577 = vlaneseq
    %v578 = vshrl.u32 %v577, 7
    %v579 = vsub.s32 0, %v578
    %v580 = vrot.slane %v498, %v579
    %v581 = vlaneseq
    %v582 = vshrl.u32 %v581, 7
    %v583 = vsub.s32 0, %v582
    %v584 = vrot.slane %v499, %v583
    %v585 = vlaneseq
    %v586 = vshrl.u32 %v585, 7
    %v587 = vsub.s32 0, %v586
    %v588 = vrot.slane %v500, %v587
    %v589 = vlaneseq
    %v590 = vshrl.u32 %v589, 7
    %v591 = vsub.s32 0, %v590
    %v592 = vrot.slane %v515, %v591
    %v593 = vlaneseq
    %v594 = vshrl.u32 %v593, 7
    %v595 = vsub.s32 0, %v594
    %v596 = vrot.slane %v522, %v595
    %v597 = vlaneseq
    %v598 = vshrl.u32 %v597, 7
    %v599 = vsub.s32 0, %v598
    %v600 = vrot.slane %v523, %v599
    %v601 = vlaneseq
    %v602 = vshrl.u32 %v601, 7
    %v603 = vsub.s32 0, %v602
    %v604 = vrot.slane %v524, %v603
    %v605 = vlaneseq
    %v606 = vshrl.u32 %v605, 7
    %v607 = vsub.s32 0, %v606
    %v608 = vrot.slane %v539, %v607
    %v609 = vlaneseq
    %v610 = vshrl.u32 %v609, 7
    %v611 = vsub.s32 0, %v610
    %v612 = vrot.slane %v546, %v611
    %v613 = vlaneseq
    %v614 = vshrl.u32 %v613, 7
    %v615 = vsub.s32 0, %v614
    %v616 = vrot.slane %v547, %v615
    %v617 = vlaneseq
    %v618 = vshrl.u32 %v617, 7
    %v619 = vsub.s32 0, %v618
    %v620 = vrot.slane %v548, %v619
    %v621 = vlaneseq
    %v622 = vshrl.u32 %v621, 7
    %v623 = vsub.s32 0, %v622
    %v624 = vrot.slane %v563, %v623
    %v625 = vlaneseq
    %v626 = vshrl.u32 %v625, 7
    %v627 = vsub.s32 0, %v626
    %v628 = vrot.slane %v570, %v627
    %v629 = vlaneseq
    %v630 = vshrl.u32 %v629, 7
    %v631 = vsub.s32 0, %v630
    %v632 = vrot.slane %v571, %v631
    %v633 = vlaneseq
    %v634 = vshrl.u32 %v633, 7
    %v635 = vsub.s32 0, %v634
    %v636 = vrot.slane %v572, %v635
    %v653 = vmul.f32 %v576, %v228
    %v654 = vmul.f32 %v580, %v238
    %v655 = vmul.f32 %v584, %v233
    %v656 = vmul.f32 %v588, %v239
    %v657 = vmul.f32 %v592, %v228
    %v658 = vmul.f32 %v596, %v238
    %v659 = vmul.f32 %v600, %v233
    %v660 = vmul.f32 %v604, %v239
    %v661 = vmul.f32 %v608, %v228
    %v662 = vmul.f32 %v612, %v238
    %v663 = vmul.f32 %v616, %v233
    %v664 = vmul.f32 %v620, %v239
    %v665 = vmul.f32 %v624, %v228
    %v666 = vmul.f32 %v628, %v238
    %v667 = vmul.f32 %v632, %v233
    %v668 = vmul.f32 %v636, %v239
    %v669 = vsel %vm444, %v653, 0.0
    %v670 = vsel %vm444, %v654, 0.0
    %v671 = vadd.f32 %v669, %v670
    %v672 = vsel %vm444, %v655, 0.0
    %v673 = vadd.f32 %v671, %v672
    %v674 = vsel %vm444, %v656, 0.0
    %v675 = vadd.f32 %v673, %v674
    %v676 = vsel %vm444, %v657, 0.0
    %v677 = vsel %vm444, %v658, 0.0
    %v678 = vadd.f32 %v676, %v677
    %v679 = vsel %vm444, %v659, 0.0
    %v680 = vadd.f32 %v678, %v679
    %v681 = vsel %vm444, %v660, 0.0
    %v682 = vadd.f32 %v680, %v681
    %v683 = vsel %vm444, %v661, 0.0
    %v684 = vsel %vm444, %v662, 0.0
    %v685 = vadd.f32 %v683, %v684
    %v686 = vsel %vm444, %v663, 0.0
    %v687 = vadd.f32 %v685, %v686
    %v688 = vsel %vm444, %v664, 0.0
    %v689 = vadd.f32 %v687, %v688
    %v690 = vsel %vm444, %v665, 0.0
    %v691 = vsel %vm444, %v666, 0.0
    %v692 = vadd.f32 %v690, %v691
    %v693 = vsel %vm444, %v667, 0.0
    %v694 = vadd.f32 %v692, %v693
    %v695 = vsel %vm444, %v668, 0.0
    %v696 = vadd.f32 %v694, %v695
    %v697 = vmul.f32 %v576, %v451
    %v698 = vmul.f32 %v580, %v458
    %v699 = vmul.f32 %v584, %v465
    %v700 = vmul.f32 %v588, %v472
    %v701 = vmul.f32 %v592, %v451
    %v702 = vmul.f32 %v596, %v458
    %v703 = vmul.f32 %v600, %v465
    %v704 = vmul.f32 %v604, %v472
    %v705 = vmul.f32 %v608, %v451
    %v706 = vmul.f32 %v612, %v458
    %v707 = vmul.f32 %v616, %v465
    %v708 = vmul.f32 %v620, %v472
    %v709 = vmul.f32 %v624, %v451
    %v710 = vmul.f32 %v628, %v458
    %v711 = vmul.f32 %v632, %v465
    %v712 = vmul.f32 %v636, %v472
    %v713 = vsel %vm444, %v697, 0.0
    %v714 = vsel %vm444, %v698, 0.0
    %v715 = vadd.f32 %v713, %v714
    %v716 = vsel %vm444, %v699, 0.0
    %v717 = vadd.f32 %v715, %v716
    %v718 = vsel %vm444, %v700, 0.0
    %v719 = vadd.f32 %v717, %v718
    %v720 = vsel %vm444, %v701, 0.0
    %v721 = vsel %vm444, %v702, 0.0
    %v722 = vadd.f32 %v720, %v721
    %v723 = vsel %vm444, %v703, 0.0
    %v724 = vadd.f32 %v722, %v723
    %v725 = vsel %vm444, %v704, 0.0
    %v726 = vadd.f32 %v724, %v725
    %v727 = vsel %vm444, %v705, 0.0
    %v728 = vsel %vm444, %v706, 0.0
    %v729 = vadd.f32 %v727, %v728
    %v730 = vsel %vm444, %v707, 0.0
    %v731 = vadd.f32 %v729, %v730
    %v732 = vsel %vm444, %v708, 0.0
    %v733 = vadd.f32 %v731, %v732
    %v734 = vsel %vm444, %v709, 0.0
    %v735 = vsel %vm444, %v710, 0.0
    %v736 = vadd.f32 %v734, %v735
    %v737 = vsel %vm444, %v711, 0.0
    %v738 = vadd.f32 %v736, %v737
    %v739 = vsel %vm444, %v712, 0.0
    %v740 = vadd.f32 %v738, %v739
    %v741 = vadd.f32 %v248, %v228
    %v742 = vadd.f32 %v249, %v238
    %v743 = vadd.f32 %v250, %v233
    %v744 = vadd.f32 %v251, %v239
    %v745 = vmul.f32 %v451, 0.5
    %v746 = vmul.f32 %v458, 0.5
    %v747 = vmul.f32 %v465, 0.5
    %v748 = vmul.f32 %v472, 0.5
    %v749 = vadd.f32 %v741, %v745
    %v750 = vadd.f32 %v742, %v746
    %v751 = vadd.f32 %v743, %v747
    %v752 = vadd.f32 %v744, %v748
    %v753 = vmul.f32 %v675, 0.16666667
    %v754 = vmul.f32 %v682, 0.16666667
    %v755 = vmul.f32 %v689, 0.16666667
    %v756 = vmul.f32 %v696, 0.16666667
    %v757 = vadd.f32 %v749, %v753
    %v758 = vadd.f32 %v750, %v754
    %v759 = vadd.f32 %v751, %v755
    %v760 = vadd.f32 %v752, %v756
    %v761 = vmul.f32 %v248, 0.041666668
    %v762 = vmul.f32 %v249, 0.041666668
    %v763 = vmul.f32 %v250, 0.041666668
    %v764 = vmul.f32 %v251, 0.041666668
    %v765 = vmul.f32 %v228, 0.008333334
    %v766 = vmul.f32 %v238, 0.008333334
    %v767 = vmul.f32 %v233, 0.008333334
    %v768 = vmul.f32 %v239, 0.008333334
    %v769 = vadd.f32 %v761, %v765
    %v770 = vadd.f32 %v762, %v766
    %v771 = vadd.f32 %v763, %v767
    %v772 = vadd.f32 %v764, %v768
    %v773 = vmul.f32 %v451, 0.0013888889
    %v774 = vmul.f32 %v458, 0.0013888889
    %v775 = vmul.f32 %v465, 0.0013888889
    %v776 = vmul.f32 %v472, 0.0013888889
    %v777 = vadd.f32 %v769, %v773
    %v778 = vadd.f32 %v770, %v774
    %v779 = vadd.f32 %v771, %v775
    %v780 = vadd.f32 %v772, %v776
    %v781 = vmul.f32 %v675, 0.0001984127
    %v782 = vmul.f32 %v682, 0.0001984127
    %v783 = vmul.f32 %v689, 0.0001984127
    %v784 = vmul.f32 %v696, 0.0001984127
    %v785 = vadd.f32 %v777, %v781
    %v786 = vadd.f32 %v778, %v782
    %v787 = vadd.f32 %v779, %v783
    %v788 = vadd.f32 %v780, %v784
    %v789 = vmul.f32 %v719, 2.4801588e-05
    %v790 = vmul.f32 %v726, 2.4801588e-05
    %v791 = vmul.f32 %v733, 2.4801588e-05
    %v792 = vmul.f32 %v740, 2.4801588e-05
    %v793 = vadd.f32 %v785, %v789
    %v794 = vadd.f32 %v786, %v790
    %v795 = vadd.f32 %v787, %v791
    %v796 = vadd.f32 %v788, %v792
    %v802 = vunpack.c.l.s4 1966171168
    %v803 = vunpack.c.0.s8 %v802
    %v804 = vlaneseq
    %v805 = vshrl.u32 %v804, 7
    %v806 = vsub.s32 %v803, %v805
    %v807 = vrot.slane %v719, %v806
    %v808 = vcombine.high %v807, %v807
    %v810 = vunpack.c.l.s4 1966171168
    %v811 = vunpack.c.0.s8 %v810
    %v812 = vlaneseq
    %v813 = vshrl.u32 %v812, 7
    %v814 = vsub.s32 %v811, %v813
    %v815 = vrot.slane %v807, %v814
    %v817 = vunpack.c.l.s4 1966171168
    %v818 = vunpack.c.0.s8 %v817
    %v819 = vlaneseq
    %v820 = vshrl.u32 %v819, 7
    %v821 = vsub.s32 %v818, %v820
    %v822 = vrot.slane %v808, %v821
    %v823 = vcombine.high %v815, %v815
    %v824 = vcombine.high %v822, %v822
    %v826 = vunpack.c.l.s4 1966171168
    %v827 = vunpack.c.0.s8 %v826
    %v828 = vlaneseq
    %v829 = vshrl.u32 %v828, 7
    %v830 = vsub.s32 %v827, %v829
    %v831 = vrot.slane %v726, %v830
    %v832 = vcombine.high %v831, %v831
    %v834 = vunpack.c.l.s4 1966171168
    %v835 = vunpack.c.0.s8 %v834
    %v836 = vlaneseq
    %v837 = vshrl.u32 %v836, 7
    %v838 = vsub.s32 %v835, %v837
    %v839 = vrot.slane %v831, %v838
    %v841 = vunpack.c.l.s4 1966171168
    %v842 = vunpack.c.0.s8 %v841
    %v843 = vlaneseq
    %v844 = vshrl.u32 %v843, 7
    %v845 = vsub.s32 %v842, %v844
    %v846 = vrot.slane %v832, %v845
    %v847 = vcombine.high %v839, %v839
    %v848 = vcombine.high %v846, %v846
    %v850 = vunpack.c.l.s4 1966171168
    %v851 = vunpack.c.0.s8 %v850
    %v852 = vlaneseq
    %v853 = vshrl.u32 %v852, 7
    %v854 = vsub.s32 %v851, %v853
    %v855 = vrot.slane %v733, %v854
    %v856 = vcombine.high %v855, %v855
    %v858 = vunpack.c.l.s4 1966171168
    %v859 = vunpack.c.0.s8 %v858
    %v860 = vlaneseq
    %v861 = vshrl.u32 %v860, 7
    %v862 = vsub.s32 %v859, %v861
    %v863 = vrot.slane %v855, %v862
    %v865 = vunpack.c.l.s4 1966171168
    %v866 = vunpack.c.0.s8 %v865
    %v867 = vlaneseq
    %v868 = vshrl.u32 %v867, 7
    %v869 = vsub.s32 %v866, %v868
    %v870 = vrot.slane %v856, %v869
    %v871 = vcombine.high %v863, %v863
    %v872 = vcombine.high %v870, %v870
    %v874 = vunpack.c.l.s4 1966171168
    %v875 = vunpack.c.0.s8 %v874
    %v876 = vlaneseq
    %v877 = vshrl.u32 %v876, 7
    %v878 = vsub.s32 %v875, %v877
    %v879 = vrot.slane %v740, %v878
    %v880 = vcombine.high %v879, %v879
    %v882 = vunpack.c.l.s4 1966171168
    %v883 = vunpack.c.0.s8 %v882
    %v884 = vlaneseq
    %v885 = vshrl.u32 %v884, 7
    %v886 = vsub.s32 %v883, %v885
    %v887 = vrot.slane %v879, %v886
    %v889 = vunpack.c.l.s4 1966171168
    %v890 = vunpack.c.0.s8 %v889
    %v891 = vlaneseq
    %v892 = vshrl.u32 %v891, 7
    %v893 = vsub.s32 %v890, %v892
    %v894 = vrot.slane %v880, %v893
    %v895 = vcombine.high %v887, %v887
    %v896 = vcombine.high %v894, %v894
    %v897 = vlaneseq
    %v898 = vshrl.u32 %v897, 7
    %v899 = vsub.s32 0, %v898
    %v900 = vrot.slane %v815, %v899
    %v901 = vlaneseq
    %v902 = vshrl.u32 %v901, 7
    %v903 = vsub.s32 0, %v902
    %v904 = vrot.slane %v822, %v903
    %v905 = vlaneseq
    %v906 = vshrl.u32 %v905, 7
    %v907 = vsub.s32 0, %v906
    %v908 = vrot.slane %v823, %v907
    %v909 = vlaneseq
    %v910 = vshrl.u32 %v909, 7
    %v911 = vsub.s32 0, %v910
    %v912 = vrot.slane %v824, %v911
    %v913 = vlaneseq
    %v914 = vshrl.u32 %v913, 7
    %v915 = vsub.s32 0, %v914
    %v916 = vrot.slane %v839, %v915
    %v917 = vlaneseq
    %v918 = vshrl.u32 %v917, 7
    %v919 = vsub.s32 0, %v918
    %v920 = vrot.slane %v846, %v919
    %v921 = vlaneseq
    %v922 = vshrl.u32 %v921, 7
    %v923 = vsub.s32 0, %v922
    %v924 = vrot.slane %v847, %v923
    %v925 = vlaneseq
    %v926 = vshrl.u32 %v925, 7
    %v927 = vsub.s32 0, %v926
    %v928 = vrot.slane %v848, %v927
    %v929 = vlaneseq
    %v930 = vshrl.u32 %v929, 7
    %v931 = vsub.s32 0, %v930
    %v932 = vrot.slane %v863, %v931
    %v933 = vlaneseq
    %v934 = vshrl.u32 %v933, 7
    %v935 = vsub.s32 0, %v934
    %v936 = vrot.slane %v870, %v935
    %v937 = vlaneseq
    %v938 = vshrl.u32 %v937, 7
    %v939 = vsub.s32 0, %v938
    %v940 = vrot.slane %v871, %v939
    %v941 = vlaneseq
    %v942 = vshrl.u32 %v941, 7
    %v943 = vsub.s32 0, %v942
    %v944 = vrot.slane %v872, %v943
    %v945 = vlaneseq
    %v946 = vshrl.u32 %v945, 7
    %v947 = vsub.s32 0, %v946
    %v948 = vrot.slane %v887, %v947
    %v949 = vlaneseq
    %v950 = vshrl.u32 %v949, 7
    %v951 = vsub.s32 0, %v950
    %v952 = vrot.slane %v894, %v951
    %v953 = vlaneseq
    %v954 = vshrl.u32 %v953, 7
    %v955 = vsub.s32 0, %v954
    %v956 = vrot.slane %v895, %v955
    %v957 = vlaneseq
    %v958 = vshrl.u32 %v957, 7
    %v959 = vsub.s32 0, %v958
    %v960 = vrot.slane %v896, %v959
    %v977 = vmul.f32 %v900, %v793
    %v978 = vmul.f32 %v904, %v794
    %v979 = vmul.f32 %v908, %v795
    %v980 = vmul.f32 %v912, %v796
    %v981 = vmul.f32 %v916, %v793
    %v982 = vmul.f32 %v920, %v794
    %v983 = vmul.f32 %v924, %v795
    %v984 = vmul.f32 %v928, %v796
    %v985 = vmul.f32 %v932, %v793
    %v986 = vmul.f32 %v936, %v794
    %v987 = vmul.f32 %v940, %v795
    %v988 = vmul.f32 %v944, %v796
    %v989 = vmul.f32 %v948, %v793
    %v990 = vmul.f32 %v952, %v794
    %v991 = vmul.f32 %v956, %v795
    %v992 = vmul.f32 %v960, %v796
    %v993 = vsel %vm444, %v977, 0.0
    %v994 = vsel %vm444, %v978, 0.0
    %v995 = vadd.f32 %v993, %v994
    %v996 = vsel %vm444, %v979, 0.0
    %v997 = vadd.f32 %v995, %v996
    %v998 = vsel %vm444, %v980, 0.0
    %v999 = vadd.f32 %v997, %v998
    %v1000 = vsel %vm444, %v981, 0.0
    %v1001 = vsel %vm444, %v982, 0.0
    %v1002 = vadd.f32 %v1000, %v1001
    %v1003 = vsel %vm444, %v983, 0.0
    %v1004 = vadd.f32 %v1002, %v1003
    %v1005 = vsel %vm444, %v984, 0.0
    %v1006 = vadd.f32 %v1004, %v1005
    %v1007 = vsel %vm444, %v985, 0.0
    %v1008 = vsel %vm444, %v986, 0.0
    %v1009 = vadd.f32 %v1007, %v1008
    %v1010 = vsel %vm444, %v987, 0.0
    %v1011 = vadd.f32 %v1009, %v1010
    %v1012 = vsel %vm444, %v988, 0.0
    %v1013 = vadd.f32 %v1011, %v1012
    %v1014 = vsel %vm444, %v989, 0.0
    %v1015 = vsel %vm444, %v990, 0.0
    %v1016 = vadd.f32 %v1014, %v1015
    %v1017 = vsel %vm444, %v991, 0.0
    %v1018 = vadd.f32 %v1016, %v1017
    %v1019 = vsel %vm444, %v992, 0.0
    %v1020 = vadd.f32 %v1018, %v1019
    %v1021 = vadd.f32 %v757, %v999
    %v1022 = vadd.f32 %v758, %v1006
    %v1023 = vadd.f32 %v759, %v1013
    %v1024 = vadd.f32 %v760, %v1020
    %v1030 = vunpack.c.l.s4 1966171168
    %v1031 = vunpack.c.0.s8 %v1030
    %v1032 = vlaneseq
    %v1033 = vshrl.u32 %v1032, 7
    %v1034 = vsub.s32 %v1031, %v1033
    %v1035 = vrot.slane %v1021, %v1034
    %v1036 = vcombine.high %v1035, %v1035
    %v1038 = vunpack.c.l.s4 1966171168
    %v1039 = vunpack.c.0.s8 %v1038
    %v1040 = vlaneseq
    %v1041 = vshrl.u32 %v1040, 7
    %v1042 = vsub.s32 %v1039, %v1041
    %v1043 = vrot.slane %v1035, %v1042
    %v1045 = vunpack.c.l.s4 1966171168
    %v1046 = vunpack.c.0.s8 %v1045
    %v1047 = vlaneseq
    %v1048 = vshrl.u32 %v1047, 7
    %v1049 = vsub.s32 %v1046, %v1048
    %v1050 = vrot.slane %v1036, %v1049
    %v1051 = vcombine.high %v1043, %v1043
    %v1052 = vcombine.high %v1050, %v1050
    %v1054 = vunpack.c.l.s4 1966171168
    %v1055 = vunpack.c.0.s8 %v1054
    %v1056 = vlaneseq
    %v1057 = vshrl.u32 %v1056, 7
    %v1058 = vsub.s32 %v1055, %v1057
    %v1059 = vrot.slane %v1022, %v1058
    %v1060 = vcombine.high %v1059, %v1059
    %v1062 = vunpack.c.l.s4 1966171168
    %v1063 = vunpack.c.0.s8 %v1062
    %v1064 = vlaneseq
    %v1065 = vshrl.u32 %v1064, 7
    %v1066 = vsub.s32 %v1063, %v1065
    %v1067 = vrot.slane %v1059, %v1066
    %v1069 = vunpack.c.l.s4 1966171168
    %v1070 = vunpack.c.0.s8 %v1069
    %v1071 = vlaneseq
    %v1072 = vshrl.u32 %v1071, 7
    %v1073 = vsub.s32 %v1070, %v1072
    %v1074 = vrot.slane %v1060, %v1073
    %v1075 = vcombine.high %v1067, %v1067
    %v1076 = vcombine.high %v1074, %v1074
    %v1078 = vunpack.c.l.s4 1966171168
    %v1079 = vunpack.c.0.s8 %v1078
    %v1080 = vlaneseq
    %v1081 = vshrl.u32 %v1080, 7
    %v1082 = vsub.s32 %v1079, %v1081
    %v1083 = vrot.slane %v1023, %v1082
    %v1084 = vcombine.high %v1083, %v1083
    %v1086 = vunpack.c.l.s4 1966171168
    %v1087 = vunpack.c.0.s8 %v1086
    %v1088 = vlaneseq
    %v1089 = vshrl.u32 %v1088, 7
    %v1090 = vsub.s32 %v1087, %v1089
    %v1091 = vrot.slane %v1083, %v1090
    %v1093 = vunpack.c.l.s4 1966171168
    %v1094 = vunpack.c.0.s8 %v1093
    %v1095 = vlaneseq
    %v1096 = vshrl.u32 %v1095, 7
    %v1097 = vsub.s32 %v1094, %v1096
    %v1098 = vrot.slane %v1084, %v1097
    %v1099 = vcombine.high %v1091, %v1091
    %v1100 = vcombine.high %v1098, %v1098
    %v1102 = vunpack.c.l.s4 1966171168
    %v1103 = vunpack.c.0.s8 %v1102
    %v1104 = vlaneseq
    %v1105 = vshrl.u32 %v1104, 7
    %v1106 = vsub.s32 %v1103, %v1105
    %v1107 = vrot.slane %v1024, %v1106
    %v1108 = vcombine.high %v1107, %v1107
    %v1110 = vunpack.c.l.s4 1966171168
    %v1111 = vunpack.c.0.s8 %v1110
    %v1112 = vlaneseq
    %v1113 = vshrl.u32 %v1112, 7
    %v1114 = vsub.s32 %v1111, %v1113
    %v1115 = vrot.slane %v1107, %v1114
    %v1117 = vunpack.c.l.s4 1966171168
    %v1118 = vunpack.c.0.s8 %v1117
    %v1119 = vlaneseq
    %v1120 = vshrl.u32 %v1119, 7
    %v1121 = vsub.s32 %v1118, %v1120
    %v1122 = vrot.slane %v1108, %v1121
    %v1123 = vcombine.high %v1115, %v1115
    %v1124 = vcombine.high %v1122, %v1122
    %v1125 = vlaneseq
    %v1126 = vshrl.u32 %v1125, 7
    %v1127 = vsub.s32 0, %v1126
    %v1128 = vrot.slane %v1043, %v1127
    %v1129 = vlaneseq
    %v1130 = vshrl.u32 %v1129, 7
    %v1131 = vsub.s32 0, %v1130
    %v1132 = vrot.slane %v1050, %v1131
    %v1133 = vlaneseq
    %v1134 = vshrl.u32 %v1133, 7
    %v1135 = vsub.s32 0, %v1134
    %v1136 = vrot.slane %v1051, %v1135
    %v1137 = vlaneseq
    %v1138 = vshrl.u32 %v1137, 7
    %v1139 = vsub.s32 0, %v1138
    %v1140 = vrot.slane %v1052, %v1139
    %v1141 = vlaneseq
    %v1142 = vshrl.u32 %v1141, 7
    %v1143 = vsub.s32 0, %v1142
    %v1144 = vrot.slane %v1067, %v1143
    %v1145 = vlaneseq
    %v1146 = vshrl.u32 %v1145, 7
    %v1147 = vsub.s32 0, %v1146
    %v1148 = vrot.slane %v1074, %v1147
    %v1149 = vlaneseq
    %v1150 = vshrl.u32 %v1149, 7
    %v1151 = vsub.s32 0, %v1150
    %v1152 = vrot.slane %v1075, %v1151
    %v1153 = vlaneseq
    %v1154 = vshrl.u32 %v1153, 7
    %v1155 = vsub.s32 0, %v1154
    %v1156 = vrot.slane %v1076, %v1155
    %v1157 = vlaneseq
    %v1158 = vshrl.u32 %v1157, 7
    %v1159 = vsub.s32 0, %v1158
    %v1160 = vrot.slane %v1091, %v1159
    %v1161 = vlaneseq
    %v1162 = vshrl.u32 %v1161, 7
    %v1163 = vsub.s32 0, %v1162
    %v1164 = vrot.slane %v1098, %v1163
    %v1165 = vlaneseq
    %v1166 = vshrl.u32 %v1165, 7
    %v1167 = vsub.s32 0, %v1166
    %v1168 = vrot.slane %v1099, %v1167
    %v1169 = vlaneseq
    %v1170 = vshrl.u32 %v1169, 7
    %v1171 = vsub.s32 0, %v1170
    %v1172 = vrot.slane %v1100, %v1171
    %v1173 = vlaneseq
    %v1174 = vshrl.u32 %v1173, 7
    %v1175 = vsub.s32 0, %v1174
    %v1176 = vrot.slane %v1115, %v1175
    %v1177 = vlaneseq
    %v1178 = vshrl.u32 %v1177, 7
    %v1179 = vsub.s32 0, %v1178
    %v1180 = vrot.slane %v1122, %v1179
    %v1181 = vlaneseq
    %v1182 = vshrl.u32 %v1181, 7
    %v1183 = vsub.s32 0, %v1182
    %v1184 = vrot.slane %v1123, %v1183
    %v1185 = vlaneseq
    %v1186 = vshrl.u32 %v1185, 7
    %v1187 = vsub.s32 0, %v1186
    %v1188 = vrot.slane %v1124, %v1187
    %v1205 = vmul.f32 %v1128, %v1021
    %v1206 = vmul.f32 %v1132, %v1022
    %v1207 = vmul.f32 %v1136, %v1023
    %v1208 = vmul.f32 %v1140, %v1024
    %v1209 = vmul.f32 %v1144, %v1021
    %v1210 = vmul.f32 %v1148, %v1022
    %v1211 = vmul.f32 %v1152, %v1023
    %v1212 = vmul.f32 %v1156, %v1024
    %v1213 = vmul.f32 %v1160, %v1021
    %v1214 = vmul.f32 %v1164, %v1022
    %v1215 = vmul.f32 %v1168, %v1023
    %v1216 = vmul.f32 %v1172, %v1024
    %v1217 = vmul.f32 %v1176, %v1021
    %v1218 = vmul.f32 %v1180, %v1022
    %v1219 = vmul.f32 %v1184, %v1023
    %v1220 = vmul.f32 %v1188, %v1024
    %v1221 = vsel %vm444, %v1205, 0.0
    %v1222 = vsel %vm444, %v1206, 0.0
    %v1223 = vadd.f32 %v1221, %v1222
    %v1224 = vsel %vm444, %v1207, 0.0
    %v1225 = vadd.f32 %v1223, %v1224
    %v1226 = vsel %vm444, %v1208, 0.0
    %v1227 = vadd.f32 %v1225, %v1226
    %v1228 = vsel %vm444, %v1209, 0.0
    %v1229 = vsel %vm444, %v1210, 0.0
    %v1230 = vadd.f32 %v1228, %v1229
    %v1231 = vsel %vm444, %v1211, 0.0
    %v1232 = vadd.f32 %v1230, %v1231
    %v1233 = vsel %vm444, %v1212, 0.0
    %v1234 = vadd.f32 %v1232, %v1233
    %v1235 = vsel %vm444, %v1213, 0.0
    %v1236 = vsel %vm444, %v1214, 0.0
    %v1237 = vadd.f32 %v1235, %v1236
    %v1238 = vsel %vm444, %v1215, 0.0
    %v1239 = vadd.f32 %v1237, %v1238
    %v1240 = vsel %vm444, %v1216, 0.0
    %v1241 = vadd.f32 %v1239, %v1240
    %v1242 = vsel %vm444, %v1217, 0.0
    %v1243 = vsel %vm444, %v1218, 0.0
    %v1244 = vadd.f32 %v1242, %v1243
    %v1245 = vsel %vm444, %v1219, 0.0
    %v1246 = vadd.f32 %v1244, %v1245
    %v1247 = vsel %vm444, %v1220, 0.0
    %v1248 = vadd.f32 %v1246, %v1247
    %v1254 = vunpack.c.l.s4 1966171168
    %v1255 = vunpack.c.0.s8 %v1254
    %v1256 = vlaneseq
    %v1257 = vshrl.u32 %v1256, 7
    %v1258 = vsub.s32 %v1255, %v1257
    %v1259 = vrot.slane %v1227, %v1258
    %v1260 = vcombine.high %v1259, %v1259
    %v1262 = vunpack.c.l.s4 1966171168
    %v1263 = vunpack.c.0.s8 %v1262
    %v1264 = vlaneseq
    %v1265 = vshrl.u32 %v1264, 7
    %v1266 = vsub.s32 %v1263, %v1265
    %v1267 = vrot.slane %v1259, %v1266
    %v1269 = vunpack.c.l.s4 1966171168
    %v1270 = vunpack.c.0.s8 %v1269
    %v1271 = vlaneseq
    %v1272 = vshrl.u32 %v1271, 7
    %v1273 = vsub.s32 %v1270, %v1272
    %v1274 = vrot.slane %v1260, %v1273
    %v1275 = vcombine.high %v1267, %v1267
    %v1276 = vcombine.high %v1274, %v1274
    %v1278 = vunpack.c.l.s4 1966171168
    %v1279 = vunpack.c.0.s8 %v1278
    %v1280 = vlaneseq
    %v1281 = vshrl.u32 %v1280, 7
    %v1282 = vsub.s32 %v1279, %v1281
    %v1283 = vrot.slane %v1234, %v1282
    %v1284 = vcombine.high %v1283, %v1283
    %v1286 = vunpack.c.l.s4 1966171168
    %v1287 = vunpack.c.0.s8 %v1286
    %v1288 = vlaneseq
    %v1289 = vshrl.u32 %v1288, 7
    %v1290 = vsub.s32 %v1287, %v1289
    %v1291 = vrot.slane %v1283, %v1290
    %v1293 = vunpack.c.l.s4 1966171168
    %v1294 = vunpack.c.0.s8 %v1293
    %v1295 = vlaneseq
    %v1296 = vshrl.u32 %v1295, 7
    %v1297 = vsub.s32 %v1294, %v1296
    %v1298 = vrot.slane %v1284, %v1297
    %v1299 = vcombine.high %v1291, %v1291
    %v1300 = vcombine.high %v1298, %v1298
    %v1302 = vunpack.c.l.s4 1966171168
    %v1303 = vunpack.c.0.s8 %v1302
    %v1304 = vlaneseq
    %v1305 = vshrl.u32 %v1304, 7
    %v1306 = vsub.s32 %v1303, %v1305
    %v1307 = vrot.slane %v1241, %v1306
    %v1308 = vcombine.high %v1307, %v1307
    %v1310 = vunpack.c.l.s4 1966171168
    %v1311 = vunpack.c.0.s8 %v1310
    %v1312 = vlaneseq
    %v1313 = vshrl.u32 %v1312, 7
    %v1314 = vsub.s32 %v1311, %v1313
    %v1315 = vrot.slane %v1307, %v1314
    %v1317 = vunpack.c.l.s4 1966171168
    %v1318 = vunpack.c.0.s8 %v1317
    %v1319 = vlaneseq
    %v1320 = vshrl.u32 %v1319, 7
    %v1321 = vsub.s32 %v1318, %v1320
    %v1322 = vrot.slane %v1308, %v1321
    %v1323 = vcombine.high %v1315, %v1315
    %v1324 = vcombine.high %v1322, %v1322
    %v1326 = vunpack.c.l.s4 1966171168
    %v1327 = vunpack.c.0.s8 %v1326
    %v1328 = vlaneseq
    %v1329 = vshrl.u32 %v1328, 7
    %v1330 = vsub.s32 %v1327, %v1329
    %v1331 = vrot.slane %v1248, %v1330
    %v1332 = vcombine.high %v1331, %v1331
    %v1334 = vunpack.c.l.s4 1966171168
    %v1335 = vunpack.c.0.s8 %v1334
    %v1336 = vlaneseq
    %v1337 = vshrl.u32 %v1336, 7
    %v1338 = vsub.s32 %v1335, %v1337
    %v1339 = vrot.slane %v1331, %v1338
    %v1341 = vunpack.c.l.s4 1966171168
    %v1342 = vunpack.c.0.s8 %v1341
    %v1343 = vlaneseq
    %v1344 = vshrl.u32 %v1343, 7
    %v1345 = vsub.s32 %v1342, %v1344
    %v1346 = vrot.slane %v1332, %v1345
    %v1347 = vcombine.high %v1339, %v1339
    %v1348 = vcombine.high %v1346, %v1346
    %v1349 = vlaneseq
    %v1350 = vshrl.u32 %v1349, 7
    %v1351 = vsub.s32 0, %v1350
    %v1352 = vrot.slane %v1267, %v1351
    %v1353 = vlaneseq
    %v1354 = vshrl.u32 %v1353, 7
    %v1355 = vsub.s32 0, %v1354
    %v1356 = vrot.slane %v1274, %v1355
    %v1357 = vlaneseq
    %v1358 = vshrl.u32 %v1357, 7
    %v1359 = vsub.s32 0, %v1358
    %v1360 = vrot.slane %v1275, %v1359
    %v1361 = vlaneseq
    %v1362 = vshrl.u32 %v1361, 7
    %v1363 = vsub.s32 0, %v1362
    %v1364 = vrot.slane %v1276, %v1363
    %v1365 = vlaneseq
    %v1366 = vshrl.u32 %v1365, 7
    %v1367 = vsub.s32 0, %v1366
    %v1368 = vrot.slane %v1291, %v1367
    %v1369 = vlaneseq
    %v1370 = vshrl.u32 %v1369, 7
    %v1371 = vsub.s32 0, %v1370
    %v1372 = vrot.slane %v1298, %v1371
    %v1373 = vlaneseq
    %v1374 = vshrl.u32 %v1373, 7
    %v1375 = vsub.s32 0, %v1374
    %v1376 = vrot.slane %v1299, %v1375
    %v1377 = vlaneseq
    %v1378 = vshrl.u32 %v1377, 7
    %v1379 = vsub.s32 0, %v1378
    %v1380 = vrot.slane %v1300, %v1379
    %v1381 = vlaneseq
    %v1382 = vshrl.u32 %v1381, 7
    %v1383 = vsub.s32 0, %v1382
    %v1384 = vrot.slane %v1315, %v1383
    %v1385 = vlaneseq
    %v1386 = vshrl.u32 %v1385, 7
    %v1387 = vsub.s32 0, %v1386
    %v1388 = vrot.slane %v1322, %v1387
    %v1389 = vlaneseq
    %v1390 = vshrl.u32 %v1389, 7
    %v1391 = vsub.s32 0, %v1390
    %v1392 = vrot.slane %v1323, %v1391
    %v1393 = vlaneseq
    %v1394 = vshrl.u32 %v1393, 7
    %v1395 = vsub.s32 0, %v1394
    %v1396 = vrot.slane %v1324, %v1395
    %v1397 = vlaneseq
    %v1398 = vshrl.u32 %v1397, 7
    %v1399 = vsub.s32 0, %v1398
    %v1400 = vrot.slane %v1339, %v1399
    %v1401 = vlaneseq
    %v1402 = vshrl.u32 %v1401, 7
    %v1403 = vsub.s32 0, %v1402
    %v1404 = vrot.slane %v1346, %v1403
    %v1405 = vlaneseq
    %v1406 = vshrl.u32 %v1405, 7
    %v1407 = vsub.s32 0, %v1406
    %v1408 = vrot.slane %v1347, %v1407
    %v1409 = vlaneseq
    %v1410 = vshrl.u32 %v1409, 7
    %v1411 = vsub.s32 0, %v1410
    %v1412 = vrot.slane %v1348, %v1411
    %v1429 = vmul.f32 %v1352, %v1227
    %v1430 = vmul.f32 %v1356, %v1234
    %v1431 = vmul.f32 %v1360, %v1241
    %v1432 = vmul.f32 %v1364, %v1248
    %v1433 = vmul.f32 %v1368, %v1227
    %v1434 = vmul.f32 %v1372, %v1234
    %v1435 = vmul.f32 %v1376, %v1241
    %v1436 = vmul.f32 %v1380, %v1248
    %v1437 = vmul.f32 %v1384, %v1227
    %v1438 = vmul.f32 %v1388, %v1234
    %v1439 = vmul.f32 %v1392, %v1241
    %v1440 = vmul.f32 %v1396, %v1248
    %v1441 = vmul.f32 %v1400, %v1227
    %v1442 = vmul.f32 %v1404, %v1234
    %v1443 = vmul.f32 %v1408, %v1241
    %v1444 = vmul.f32 %v1412, %v1248
    %v1445 = vsel %vm444, %v1429, 0.0
    %v1446 = vsel %vm444, %v1430, 0.0
    %v1447 = vadd.f32 %v1445, %v1446
    %v1448 = vsel %vm444, %v1431, 0.0
    %v1449 = vadd.f32 %v1447, %v1448
    %v1450 = vsel %vm444, %v1432, 0.0
    %v1451 = vadd.f32 %v1449, %v1450
    %v1452 = vsel %vm444, %v1433, 0.0
    %v1453 = vsel %vm444, %v1434, 0.0
    %v1454 = vadd.f32 %v1452, %v1453
    %v1455 = vsel %vm444, %v1435, 0.0
    %v1456 = vadd.f32 %v1454, %v1455
    %v1457 = vsel %vm444, %v1436, 0.0
    %v1458 = vadd.f32 %v1456, %v1457
    %v1459 = vsel %vm444, %v1437, 0.0
    %v1460 = vsel %vm444, %v1438, 0.0
    %v1461 = vadd.f32 %v1459, %v1460
    %v1462 = vsel %vm444, %v1439, 0.0
    %v1463 = vadd.f32 %v1461, %v1462
    %v1464 = vsel %vm444, %v1440, 0.0
    %v1465 = vadd.f32 %v1463, %v1464
    %v1466 = vsel %vm444, %v1441, 0.0
    %v1467 = vsel %vm444, %v1442, 0.0
    %v1468 = vadd.f32 %v1466, %v1467
    %v1469 = vsel %vm444, %v1443, 0.0
    %v1470 = vadd.f32 %v1468, %v1469
    %v1471 = vsel %vm444, %v1444, 0.0
    %v1472 = vadd.f32 %v1470, %v1471
    %v1478 = vunpack.c.l.s4 1966171168
    %v1479 = vunpack.c.0.s8 %v1478
    %v1480 = vlaneseq
    %v1481 = vshrl.u32 %v1480, 7
    %v1482 = vsub.s32 %v1479, %v1481
    %v1483 = vrot.slane %v1451, %v1482
    %v1484 = vcombine.high %v1483, %v1483
    %v1486 = vunpack.c.l.s4 1966171168
    %v1487 = vunpack.c.0.s8 %v1486
    %v1488 = vlaneseq
    %v1489 = vshrl.u32 %v1488, 7
    %v1490 = vsub.s32 %v1487, %v1489
    %v1491 = vrot.slane %v1483, %v1490
    %v1493 = vunpack.c.l.s4 1966171168
    %v1494 = vunpack.c.0.s8 %v1493
    %v1495 = vlaneseq
    %v1496 = vshrl.u32 %v1495, 7
    %v1497 = vsub.s32 %v1494, %v1496
    %v1498 = vrot.slane %v1484, %v1497
    %v1499 = vcombine.high %v1491, %v1491
    %v1500 = vcombine.high %v1498, %v1498
    %v1502 = vunpack.c.l.s4 1966171168
    %v1503 = vunpack.c.0.s8 %v1502
    %v1504 = vlaneseq
    %v1505 = vshrl.u32 %v1504, 7
    %v1506 = vsub.s32 %v1503, %v1505
    %v1507 = vrot.slane %v1458, %v1506
    %v1508 = vcombine.high %v1507, %v1507
    %v1510 = vunpack.c.l.s4 1966171168
    %v1511 = vunpack.c.0.s8 %v1510
    %v1512 = vlaneseq
    %v1513 = vshrl.u32 %v1512, 7
    %v1514 = vsub.s32 %v1511, %v1513
    %v1515 = vrot.slane %v1507, %v1514
    %v1517 = vunpack.c.l.s4 1966171168
    %v1518 = vunpack.c.0.s8 %v1517
    %v1519 = vlaneseq
    %v1520 = vshrl.u32 %v1519, 7
    %v1521 = vsub.s32 %v1518, %v1520
    %v1522 = vrot.slane %v1508, %v1521
    %v1523 = vcombine.high %v1515, %v1515
    %v1524 = vcombine.high %v1522, %v1522
    %v1526 = vunpack.c.l.s4 1966171168
    %v1527 = vunpack.c.0.s8 %v1526
    %v1528 = vlaneseq
    %v1529 = vshrl.u32 %v1528, 7
    %v1530 = vsub.s32 %v1527, %v1529
    %v1531 = vrot.slane %v1465, %v1530
    %v1532 = vcombine.high %v1531, %v1531
    %v1534 = vunpack.c.l.s4 1966171168
    %v1535 = vunpack.c.0.s8 %v1534
    %v1536 = vlaneseq
    %v1537 = vshrl.u32 %v1536, 7
    %v1538 = vsub.s32 %v1535, %v1537
    %v1539 = vrot.slane %v1531, %v1538
    %v1541 = vunpack.c.l.s4 1966171168
    %v1542 = vunpack.c.0.s8 %v1541
    %v1543 = vlaneseq
    %v1544 = vshrl.u32 %v1543, 7
    %v1545 = vsub.s32 %v1542, %v1544
    %v1546 = vrot.slane %v1532, %v1545
    %v1547 = vcombine.high %v1539, %v1539
    %v1548 = vcombine.high %v1546, %v1546
    %v1550 = vunpack.c.l.s4 1966171168
    %v1551 = vunpack.c.0.s8 %v1550
    %v1552 = vlaneseq
    %v1553 = vshrl.u32 %v1552, 7
    %v1554 = vsub.s32 %v1551, %v1553
    %v1555 = vrot.slane %v1472, %v1554
    %v1556 = vcombine.high %v1555, %v1555
    %v1558 = vunpack.c.l.s4 1966171168
    %v1559 = vunpack.c.0.s8 %v1558
    %v1560 = vlaneseq
    %v1561 = vshrl.u32 %v1560, 7
    %v1562 = vsub.s32 %v1559, %v1561
    %v1563 = vrot.slane %v1555, %v1562
    %v1565 = vunpack.c.l.s4 1966171168
    %v1566 = vunpack.c.0.s8 %v1565
    %v1567 = vlaneseq
    %v1568 = vshrl.u32 %v1567, 7
    %v1569 = vsub.s32 %v1566, %v1568
    %v1570 = vrot.slane %v1556, %v1569
    %v1571 = vcombine.high %v1563, %v1563
    %v1572 = vcombine.high %v1570, %v1570
    %v1573 = vlaneseq
    %v1574 = vshrl.u32 %v1573, 7
    %v1575 = vsub.s32 0, %v1574
    %v1576 = vrot.slane %v1491, %v1575
    %v1577 = vlaneseq
    %v1578 = vshrl.u32 %v1577, 7
    %v1579 = vsub.s32 0, %v1578
    %v1580 = vrot.slane %v1498, %v1579
    %v1581 = vlaneseq
    %v1582 = vshrl.u32 %v1581, 7
    %v1583 = vsub.s32 0, %v1582
    %v1584 = vrot.slane %v1499, %v1583
    %v1585 = vlaneseq
    %v1586 = vshrl.u32 %v1585, 7
    %v1587 = vsub.s32 0, %v1586
    %v1588 = vrot.slane %v1500, %v1587
    %v1589 = vlaneseq
    %v1590 = vshrl.u32 %v1589, 7
    %v1591 = vsub.s32 0, %v1590
    %v1592 = vrot.slane %v1515, %v1591
    %v1593 = vlaneseq
    %v1594 = vshrl.u32 %v1593, 7
    %v1595 = vsub.s32 0, %v1594
    %v1596 = vrot.slane %v1522, %v1595
    %v1597 = vlaneseq
    %v1598 = vshrl.u32 %v1597, 7
    %v1599 = vsub.s32 0, %v1598
    %v1600 = vrot.slane %v1523, %v1599
    %v1601 = vlaneseq
    %v1602 = vshrl.u32 %v1601, 7
    %v1603 = vsub.s32 0, %v1602
    %v1604 = vrot.slane %v1524, %v1603
    %v1605 = vlaneseq
    %v1606 = vshrl.u32 %v1605, 7
    %v1607 = vsub.s32 0, %v1606
    %v1608 = vrot.slane %v1539, %v1607
    %v1609 = vlaneseq
    %v1610 = vshrl.u32 %v1609, 7
    %v1611 = vsub.s32 0, %v1610
    %v1612 = vrot.slane %v1546, %v1611
    %v1613 = vlaneseq
    %v1614 = vshrl.u32 %v1613, 7
    %v1615 = vsub.s32 0, %v1614
    %v1616 = vrot.slane %v1547, %v1615
    %v1617 = vlaneseq
    %v1618 = vshrl.u32 %v1617, 7
    %v1619 = vsub.s32 0, %v1618
    %v1620 = vrot.slane %v1548, %v1619
    %v1621 = vlaneseq
    %v1622 = vshrl.u32 %v1621, 7
    %v1623 = vsub.s32 0, %v1622
    %v1624 = vrot.slane %v1563, %v1623
    %v1625 = vlaneseq
    %v1626 = vshrl.u32 %v1625, 7
    %v1627 = vsub.s32 0, %v1626
    %v1628 = vrot.slane %v1570, %v1627
    %v1629 = vlaneseq
    %v1630 = vshrl.u32 %v1629, 7
    %v1631 = vsub.s32 0, %v1630
    %v1632 = vrot.slane %v1571, %v1631
    %v1633 = vlaneseq
    %v1634 = vshrl.u32 %v1633, 7
    %v1635 = vsub.s32 0, %v1634
    %v1636 = vrot.slane %v1572, %v1635
    %v1653 = vmul.f32 %v1576, %v1451
    %v1654 = vmul.f32 %v1580, %v1458
    %v1655 = vmul.f32 %v1584, %v1465
    %v1656 = vmul.f32 %v1588, %v1472
    %v1657 = vmul.f32 %v1592, %v1451
    %v1658 = vmul.f32 %v1596, %v1458
    %v1659 = vmul.f32 %v1600, %v1465
    %v1660 = vmul.f32 %v1604, %v1472
    %v1661 = vmul.f32 %v1608, %v1451
    %v1662 = vmul.f32 %v1612, %v1458
    %v1663 = vmul.f32 %v1616, %v1465
    %v1664 = vmul.f32 %v1620, %v1472
    %v1665 = vmul.f32 %v1624, %v1451
    %v1666 = vmul.f32 %v1628, %v1458
    %v1667 = vmul.f32 %v1632, %v1465
    %v1668 = vmul.f32 %v1636, %v1472
    %v1669 = vsel %vm444, %v1653, 0.0
    %v1670 = vsel %vm444, %v1654, 0.0
    %v1671 = vadd.f32 %v1669, %v1670
    %v1672 = vsel %vm444, %v1655, 0.0
    %v1673 = vadd.f32 %v1671, %v1672
    %v1674 = vsel %vm444, %v1656, 0.0
    %v1675 = vadd.f32 %v1673, %v1674
    %v1676 = vsel %vm444, %v1657, 0.0
    %v1677 = vsel %vm444, %v1658, 0.0
    %v1678 = vadd.f32 %v1676, %v1677
    %v1679 = vsel %vm444, %v1659, 0.0
    %v1680 = vadd.f32 %v1678, %v1679
    %v1681 = vsel %vm444, %v1660, 0.0
    %v1682 = vadd.f32 %v1680, %v1681
    %v1683 = vsel %vm444, %v1661, 0.0
    %v1684 = vsel %vm444, %v1662, 0.0
    %v1685 = vadd.f32 %v1683, %v1684
    %v1686 = vsel %vm444, %v1663, 0.0
    %v1687 = vadd.f32 %v1685, %v1686
    %v1688 = vsel %vm444, %v1664, 0.0
    %v1689 = vadd.f32 %v1687, %v1688
    %v1690 = vsel %vm444, %v1665, 0.0
    %v1691 = vsel %vm444, %v1666, 0.0
    %v1692 = vadd.f32 %v1690, %v1691
    %v1693 = vsel %vm444, %v1667, 0.0
    %v1694 = vadd.f32 %v1692, %v1693
    %v1695 = vsel %vm444, %v1668, 0.0
    %v1696 = vadd.f32 %v1694, %v1695
    %v1702 = vunpack.c.l.s4 1966171168
    %v1703 = vunpack.c.0.s8 %v1702
    %v1704 = vlaneseq
    %v1705 = vshrl.u32 %v1704, 7
    %v1706 = vsub.s32 %v1703, %v1705
    %v1707 = vrot.slane %v1675, %v1706
    %v1708 = vcombine.high %v1707, %v1707
    %v1710 = vunpack.c.l.s4 1966171168
    %v1711 = vunpack.c.0.s8 %v1710
    %v1712 = vlaneseq
    %v1713 = vshrl.u32 %v1712, 7
    %v1714 = vsub.s32 %v1711, %v1713
    %v1715 = vrot.slane %v1707, %v1714
    %v1717 = vunpack.c.l.s4 1966171168
    %v1718 = vunpack.c.0.s8 %v1717
    %v1719 = vlaneseq
    %v1720 = vshrl.u32 %v1719, 7
    %v1721 = vsub.s32 %v1718, %v1720
    %v1722 = vrot.slane %v1708, %v1721
    %v1723 = vcombine.high %v1715, %v1715
    %v1724 = vcombine.high %v1722, %v1722
    %v1726 = vunpack.c.l.s4 1966171168
    %v1727 = vunpack.c.0.s8 %v1726
    %v1728 = vlaneseq
    %v1729 = vshrl.u32 %v1728, 7
    %v1730 = vsub.s32 %v1727, %v1729
    %v1731 = vrot.slane %v1682, %v1730
    %v1732 = vcombine.high %v1731, %v1731
    %v1734 = vunpack.c.l.s4 1966171168
    %v1735 = vunpack.c.0.s8 %v1734
    %v1736 = vlaneseq
    %v1737 = vshrl.u32 %v1736, 7
    %v1738 = vsub.s32 %v1735, %v1737
    %v1739 = vrot.slane %v1731, %v1738
    %v1741 = vunpack.c.l.s4 1966171168
    %v1742 = vunpack.c.0.s8 %v1741
    %v1743 = vlaneseq
    %v1744 = vshrl.u32 %v1743, 7
    %v1745 = vsub.s32 %v1742, %v1744
    %v1746 = vrot.slane %v1732, %v1745
    %v1747 = vcombine.high %v1739, %v1739
    %v1748 = vcombine.high %v1746, %v1746
    %v1750 = vunpack.c.l.s4 1966171168
    %v1751 = vunpack.c.0.s8 %v1750
    %v1752 = vlaneseq
    %v1753 = vshrl.u32 %v1752, 7
    %v1754 = vsub.s32 %v1751, %v1753
    %v1755 = vrot.slane %v1689, %v1754
    %v1756 = vcombine.high %v1755, %v1755
    %v1758 = vunpack.c.l.s4 1966171168
    %v1759 = vunpack.c.0.s8 %v1758
    %v1760 = vlaneseq
    %v1761 = vshrl.u32 %v1760, 7
    %v1762 = vsub.s32 %v1759, %v1761
    %v1763 = vrot.slane %v1755, %v1762
    %v1765 = vunpack.c.l.s4 1966171168
    %v1766 = vunpack.c.0.s8 %v1765
    %v1767 = vlaneseq
    %v1768 = vshrl.u32 %v1767, 7
    %v1769 = vsub.s32 %v1766, %v1768
    %v1770 = vrot.slane %v1756, %v1769
    %v1771 = vcombine.high %v1763, %v1763
    %v1772 = vcombine.high %v1770, %v1770
    %v1774 = vunpack.c.l.s4 1966171168
    %v1775 = vunpack.c.0.s8 %v1774
    %v1776 = vlaneseq
    %v1777 = vshrl.u32 %v1776, 7
    %v1778 = vsub.s32 %v1775, %v1777
    %v1779 = vrot.slane %v1696, %v1778
    %v1780 = vcombine.high %v1779, %v1779
    %v1782 = vunpack.c.l.s4 1966171168
    %v1783 = vunpack.c.0.s8 %v1782
    %v1784 = vlaneseq
    %v1785 = vshrl.u32 %v1784, 7
    %v1786 = vsub.s32 %v1783, %v1785
    %v1787 = vrot.slane %v1779, %v1786
    %v1789 = vunpack.c.l.s4 1966171168
    %v1790 = vunpack.c.0.s8 %v1789
    %v1791 = vlaneseq
    %v1792 = vshrl.u32 %v1791, 7
    %v1793 = vsub.s32 %v1790, %v1792
    %v1794 = vrot.slane %v1780, %v1793
    %v1795 = vcombine.high %v1787, %v1787
    %v1796 = vcombine.high %v1794, %v1794
    %v1797 = vlaneseq
    %v1798 = vshrl.u32 %v1797, 7
    %v1799 = vsub.s32 0, %v1798
    %v1800 = vrot.slane %v1715, %v1799
    %v1801 = vlaneseq
    %v1802 = vshrl.u32 %v1801, 7
    %v1803 = vsub.s32 0, %v1802
    %v1804 = vrot.slane %v1722, %v1803
    %v1805 = vlaneseq
    %v1806 = vshrl.u32 %v1805, 7
    %v1807 = vsub.s32 0, %v1806
    %v1808 = vrot.slane %v1723, %v1807
    %v1809 = vlaneseq
    %v1810 = vshrl.u32 %v1809, 7
    %v1811 = vsub.s32 0, %v1810
    %v1812 = vrot.slane %v1724, %v1811
    %v1813 = vlaneseq
    %v1814 = vshrl.u32 %v1813, 7
    %v1815 = vsub.s32 0, %v1814
    %v1816 = vrot.slane %v1739, %v1815
    %v1817 = vlaneseq
    %v1818 = vshrl.u32 %v1817, 7
    %v1819 = vsub.s32 0, %v1818
    %v1820 = vrot.slane %v1746, %v1819
    %v1821 = vlaneseq
    %v1822 = vshrl.u32 %v1821, 7
    %v1823 = vsub.s32 0, %v1822
    %v1824 = vrot.slane %v1747, %v1823
    %v1825 = vlaneseq
    %v1826 = vshrl.u32 %v1825, 7
    %v1827 = vsub.s32 0, %v1826
    %v1828 = vrot.slane %v1748, %v1827
    %v1829 = vlaneseq
    %v1830 = vshrl.u32 %v1829, 7
    %v1831 = vsub.s32 0, %v1830
    %v1832 = vrot.slane %v1763, %v1831
    %v1833 = vlaneseq
    %v1834 = vshrl.u32 %v1833, 7
    %v1835 = vsub.s32 0, %v1834
    %v1836 = vrot.slane %v1770, %v1835
    %v1837 = vlaneseq
    %v1838 = vshrl.u32 %v1837, 7
    %v1839 = vsub.s32 0, %v1838
    %v1840 = vrot.slane %v1771, %v1839
    %v1841 = vlaneseq
    %v1842 = vshrl.u32 %v1841, 7
    %v1843 = vsub.s32 0, %v1842
    %v1844 = vrot.slane %v1772, %v1843
    %v1845 = vlaneseq
    %v1846 = vshrl.u32 %v1845, 7
    %v1847 = vsub.s32 0, %v1846
    %v1848 = vrot.slane %v1787, %v1847
    %v1849 = vlaneseq
    %v1850 = vshrl.u32 %v1849, 7
    %v1851 = vsub.s32 0, %v1850
    %v1852 = vrot.slane %v1794, %v1851
    %v1853 = vlaneseq
    %v1854 = vshrl.u32 %v1853, 7
    %v1855 = vsub.s32 0, %v1854
    %v1856 = vrot.slane %v1795, %v1855
    %v1857 = vlaneseq
    %v1858 = vshrl.u32 %v1857, 7
    %v1859 = vsub.s32 0, %v1858
    %v1860 = vrot.slane %v1796, %v1859
    %v1877 = vmul.f32 %v1800, %v1675
    %v1878 = vmul.f32 %v1804, %v1682
    %v1879 = vmul.f32 %v1808, %v1689
    %v1880 = vmul.f32 %v1812, %v1696
    %v1881 = vmul.f32 %v1816, %v1675
    %v1882 = vmul.f32 %v1820, %v1682
    %v1883 = vmul.f32 %v1824, %v1689
    %v1884 = vmul.f32 %v1828, %v1696
    %v1885 = vmul.f32 %v1832, %v1675
    %v1886 = vmul.f32 %v1836, %v1682
    %v1887 = vmul.f32 %v1840, %v1689
    %v1888 = vmul.f32 %v1844, %v1696
    %v1889 = vmul.f32 %v1848, %v1675
    %v1890 = vmul.f32 %v1852, %v1682
    %v1891 = vmul.f32 %v1856, %v1689
    %v1892 = vmul.f32 %v1860, %v1696
    %v1893 = vsel %vm444, %v1877, 0.0
    %v1894 = vsel %vm444, %v1878, 0.0
    %v1895 = vadd.f32 %v1893, %v1894
    %v1896 = vsel %vm444, %v1879, 0.0
    %v1897 = vadd.f32 %v1895, %v1896
    %v1898 = vsel %vm444, %v1880, 0.0
    %v1899 = vadd.f32 %v1897, %v1898
    %v1900 = vsel %vm444, %v1881, 0.0
    %v1901 = vsel %vm444, %v1882, 0.0
    %v1902 = vadd.f32 %v1900, %v1901
    %v1903 = vsel %vm444, %v1883, 0.0
    %v1904 = vadd.f32 %v1902, %v1903
    %v1905 = vsel %vm444, %v1884, 0.0
    %v1906 = vadd.f32 %v1904, %v1905
    %v1907 = vsel %vm444, %v1885, 0.0
    %v1908 = vsel %vm444, %v1886, 0.0
    %v1909 = vadd.f32 %v1907, %v1908
    %v1910 = vsel %vm444, %v1887, 0.0
    %v1911 = vadd.f32 %v1909, %v1910
    %v1912 = vsel %vm444, %v1888, 0.0
    %v1913 = vadd.f32 %v1911, %v1912
    %v1914 = vsel %vm444, %v1889, 0.0
    %v1915 = vsel %vm444, %v1890, 0.0
    %v1916 = vadd.f32 %v1914, %v1915
    %v1917 = vsel %vm444, %v1891, 0.0
    %v1918 = vadd.f32 %v1916, %v1917
    %v1919 = vsel %vm444, %v1892, 0.0
    %v1920 = vadd.f32 %v1918, %v1919
    %v1921 = vlaneseq
    %v1922 = vand.u32 %v1921, 127
    %vm1923 = vcmp.lt.s32.totalorder %v1922, 0
    %v1924 = vsub.s32 0, %v1922
    %v1925 = vsel %vm1923, %v1924, %v1922
    %v1926 = vshrl.u32 %v1925, 3
    %v1927 = vand.u32 %v1925, 7
    %v1928 = vsub.s32 0, %v1927
    %v1929 = vsel %vm1923, %v1928, %v1927
    %vm1930 = vcmp.ne.s32.totalorder %v1929, 0
    %vm1931 = vcmp.lt.s32.totalorder %v1929, 0
    %vm1932 = vmand %vm1931, %vm1930
    %v1933 = vadd.s32 %v1929, 8
    %v1934 = vsel %vm1932, %v1933, %v1929
    %1939 = vrot.lane.b32.xlu0 %v1899, 127
    %v1940 = vpop.permute.xlu0 %1939
    %1941 = vrot.lane.b32.xlu0 %v1906, 127
    %v1942 = vpop.permute.xlu0 %1941
    %1943 = vrot.lane.b32.xlu0 %v1913, 127
    %v1944 = vpop.permute.xlu0 %1943
    %1945 = vrot.lane.b32.xlu0 %v1920, 127
    %v1946 = vpop.permute.xlu0 %1945
    %1951 = vrot.lane.b32.xlu0 %v1899, 15
    %v1952 = vpop.permute.xlu0 %1951
    %1953 = vrot.lane.b32.xlu0 %v1906, 15
    %v1954 = vpop.permute.xlu0 %1953
    %1955 = vrot.lane.b32.xlu0 %v1913, 15
    %v1956 = vpop.permute.xlu0 %1955
    %1957 = vrot.lane.b32.xlu0 %v1920, 15
    %v1958 = vpop.permute.xlu0 %1957
    %vm1963 = vcmask 121856
    %v1964 = vsel %vm1963, %v1940, %v1952
    %v1965 = vsel %vm1963, %v1942, %v1954
    %v1966 = vsel %vm1963, %v1944, %v1956
    %v1967 = vsel %vm1963, %v1946, %v1958
    %v1968 = vadd.s32 %v1934, 1
    %vm1969 = vcmp.lt.s32.totalorder %v1968, 8
    %v1970 = vsel %vm1969, %v1964, %v248
    %v1971 = vsel %vm1969, %v1965, %v249
    %v1972 = vsel %vm1969, %v1966, %v250
    %v1973 = vsel %vm1969, %v1967, %v251
    %v1975 = vunpack.c.l.s4 1966171168
    %v1976 = vunpack.c.0.s8 %v1975
    %v1977 = vlaneseq
    %v1978 = vshrl.u32 %v1977, 7
    %v1979 = vsub.s32 %v1976, %v1978
    %v1980 = vrot.slane %v1899, %v1979
    %v1981 = vcombine.high %v1980, %v1980
    %v1983 = vunpack.c.l.s4 1966171168
    %v1984 = vunpack.c.0.s8 %v1983
    %v1985 = vlaneseq
    %v1986 = vshrl.u32 %v1985, 7
    %v1987 = vsub.s32 %v1984, %v1986
    %v1988 = vrot.slane %v1980, %v1987
    %v1990 = vunpack.c.l.s4 1966171168
    %v1991 = vunpack.c.0.s8 %v1990
    %v1992 = vlaneseq
    %v1993 = vshrl.u32 %v1992, 7
    %v1994 = vsub.s32 %v1991, %v1993
    %v1995 = vrot.slane %v1981, %v1994
    %v1996 = vcombine.high %v1988, %v1988
    %v1997 = vcombine.high %v1995, %v1995
    %v1999 = vunpack.c.l.s4 1966171168
    %v2000 = vunpack.c.0.s8 %v1999
    %v2001 = vlaneseq
    %v2002 = vshrl.u32 %v2001, 7
    %v2003 = vsub.s32 %v2000, %v2002
    %v2004 = vrot.slane %v1906, %v2003
    %v2005 = vcombine.high %v2004, %v2004
    %v2007 = vunpack.c.l.s4 1966171168
    %v2008 = vunpack.c.0.s8 %v2007
    %v2009 = vlaneseq
    %v2010 = vshrl.u32 %v2009, 7
    %v2011 = vsub.s32 %v2008, %v2010
    %v2012 = vrot.slane %v2004, %v2011
    %v2014 = vunpack.c.l.s4 1966171168
    %v2015 = vunpack.c.0.s8 %v2014
    %v2016 = vlaneseq
    %v2017 = vshrl.u32 %v2016, 7
    %v2018 = vsub.s32 %v2015, %v2017
    %v2019 = vrot.slane %v2005, %v2018
    %v2020 = vcombine.high %v2012, %v2012
    %v2021 = vcombine.high %v2019, %v2019
    %v2023 = vunpack.c.l.s4 1966171168
    %v2024 = vunpack.c.0.s8 %v2023
    %v2025 = vlaneseq
    %v2026 = vshrl.u32 %v2025, 7
    %v2027 = vsub.s32 %v2024, %v2026
    %v2028 = vrot.slane %v1913, %v2027
    %v2029 = vcombine.high %v2028, %v2028
    %v2031 = vunpack.c.l.s4 1966171168
    %v2032 = vunpack.c.0.s8 %v2031
    %v2033 = vlaneseq
    %v2034 = vshrl.u32 %v2033, 7
    %v2035 = vsub.s32 %v2032, %v2034
    %v2036 = vrot.slane %v2028, %v2035
    %v2038 = vunpack.c.l.s4 1966171168
    %v2039 = vunpack.c.0.s8 %v2038
    %v2040 = vlaneseq
    %v2041 = vshrl.u32 %v2040, 7
    %v2042 = vsub.s32 %v2039, %v2041
    %v2043 = vrot.slane %v2029, %v2042
    %v2044 = vcombine.high %v2036, %v2036
    %v2045 = vcombine.high %v2043, %v2043
    %v2047 = vunpack.c.l.s4 1966171168
    %v2048 = vunpack.c.0.s8 %v2047
    %v2049 = vlaneseq
    %v2050 = vshrl.u32 %v2049, 7
    %v2051 = vsub.s32 %v2048, %v2050
    %v2052 = vrot.slane %v1920, %v2051
    %v2053 = vcombine.high %v2052, %v2052
    %v2055 = vunpack.c.l.s4 1966171168
    %v2056 = vunpack.c.0.s8 %v2055
    %v2057 = vlaneseq
    %v2058 = vshrl.u32 %v2057, 7
    %v2059 = vsub.s32 %v2056, %v2058
    %v2060 = vrot.slane %v2052, %v2059
    %v2062 = vunpack.c.l.s4 1966171168
    %v2063 = vunpack.c.0.s8 %v2062
    %v2064 = vlaneseq
    %v2065 = vshrl.u32 %v2064, 7
    %v2066 = vsub.s32 %v2063, %v2065
    %v2067 = vrot.slane %v2053, %v2066
    %v2068 = vcombine.high %v2060, %v2060
    %v2069 = vcombine.high %v2067, %v2067
    %v2070 = vlaneseq
    %v2071 = vshrl.u32 %v2070, 7
    %v2072 = vsub.s32 0, %v2071
    %v2073 = vrot.slane %v1988, %v2072
    %v2074 = vlaneseq
    %v2075 = vshrl.u32 %v2074, 7
    %v2076 = vsub.s32 0, %v2075
    %v2077 = vrot.slane %v1995, %v2076
    %v2078 = vlaneseq
    %v2079 = vshrl.u32 %v2078, 7
    %v2080 = vsub.s32 0, %v2079
    %v2081 = vrot.slane %v1996, %v2080
    %v2082 = vlaneseq
    %v2083 = vshrl.u32 %v2082, 7
    %v2084 = vsub.s32 0, %v2083
    %v2085 = vrot.slane %v1997, %v2084
    %v2086 = vlaneseq
    %v2087 = vshrl.u32 %v2086, 7
    %v2088 = vsub.s32 0, %v2087
    %v2089 = vrot.slane %v2012, %v2088
    %v2090 = vlaneseq
    %v2091 = vshrl.u32 %v2090, 7
    %v2092 = vsub.s32 0, %v2091
    %v2093 = vrot.slane %v2019, %v2092
    %v2094 = vlaneseq
    %v2095 = vshrl.u32 %v2094, 7
    %v2096 = vsub.s32 0, %v2095
    %v2097 = vrot.slane %v2020, %v2096
    %v2098 = vlaneseq
    %v2099 = vshrl.u32 %v2098, 7
    %v2100 = vsub.s32 0, %v2099
    %v2101 = vrot.slane %v2021, %v2100
    %v2102 = vlaneseq
    %v2103 = vshrl.u32 %v2102, 7
    %v2104 = vsub.s32 0, %v2103
    %v2105 = vrot.slane %v2036, %v2104
    %v2106 = vlaneseq
    %v2107 = vshrl.u32 %v2106, 7
    %v2108 = vsub.s32 0, %v2107
    %v2109 = vrot.slane %v2043, %v2108
    %v2110 = vlaneseq
    %v2111 = vshrl.u32 %v2110, 7
    %v2112 = vsub.s32 0, %v2111
    %v2113 = vrot.slane %v2044, %v2112
    %v2114 = vlaneseq
    %v2115 = vshrl.u32 %v2114, 7
    %v2116 = vsub.s32 0, %v2115
    %v2117 = vrot.slane %v2045, %v2116
    %v2118 = vlaneseq
    %v2119 = vshrl.u32 %v2118, 7
    %v2120 = vsub.s32 0, %v2119
    %v2121 = vrot.slane %v2060, %v2120
    %v2122 = vlaneseq
    %v2123 = vshrl.u32 %v2122, 7
    %v2124 = vsub.s32 0, %v2123
    %v2125 = vrot.slane %v2067, %v2124
    %v2126 = vlaneseq
    %v2127 = vshrl.u32 %v2126, 7
    %v2128 = vsub.s32 0, %v2127
    %v2129 = vrot.slane %v2068, %v2128
    %v2130 = vlaneseq
    %v2131 = vshrl.u32 %v2130, 7
    %v2132 = vsub.s32 0, %v2131
    %v2133 = vrot.slane %v2069, %v2132
    %v2150 = vmul.f32 %v2073, %v1970
    %v2151 = vmul.f32 %v2077, %v1971
    %v2152 = vmul.f32 %v2081, %v1972
    %v2153 = vmul.f32 %v2085, %v1973
    %v2154 = vmul.f32 %v2089, %v1970
    %v2155 = vmul.f32 %v2093, %v1971
    %v2156 = vmul.f32 %v2097, %v1972
    %v2157 = vmul.f32 %v2101, %v1973
    %v2158 = vmul.f32 %v2105, %v1970
    %v2159 = vmul.f32 %v2109, %v1971
    %v2160 = vmul.f32 %v2113, %v1972
    %v2161 = vmul.f32 %v2117, %v1973
    %v2162 = vmul.f32 %v2121, %v1970
    %v2163 = vmul.f32 %v2125, %v1971
    %v2164 = vmul.f32 %v2129, %v1972
    %v2165 = vmul.f32 %v2133, %v1973
    %v2166 = vsel %vm444, %v2150, 0.0
    %v2167 = vsel %vm444, %v2151, 0.0
    %v2168 = vadd.f32 %v2166, %v2167
    %v2169 = vsel %vm444, %v2152, 0.0
    %v2170 = vadd.f32 %v2168, %v2169
    %v2171 = vsel %vm444, %v2153, 0.0
    %v2172 = vadd.f32 %v2170, %v2171
    %v2173 = vsel %vm444, %v2154, 0.0
    %v2174 = vsel %vm444, %v2155, 0.0
    %v2175 = vadd.f32 %v2173, %v2174
    %v2176 = vsel %vm444, %v2156, 0.0
    %v2177 = vadd.f32 %v2175, %v2176
    %v2178 = vsel %vm444, %v2157, 0.0
    %v2179 = vadd.f32 %v2177, %v2178
    %v2180 = vsel %vm444, %v2158, 0.0
    %v2181 = vsel %vm444, %v2159, 0.0
    %v2182 = vadd.f32 %v2180, %v2181
    %v2183 = vsel %vm444, %v2160, 0.0
    %v2184 = vadd.f32 %v2182, %v2183
    %v2185 = vsel %vm444, %v2161, 0.0
    %v2186 = vadd.f32 %v2184, %v2185
    %v2187 = vsel %vm444, %v2162, 0.0
    %v2188 = vsel %vm444, %v2163, 0.0
    %v2189 = vadd.f32 %v2187, %v2188
    %v2190 = vsel %vm444, %v2164, 0.0
    %v2191 = vadd.f32 %v2189, %v2190
    %v2192 = vsel %vm444, %v2165, 0.0
    %v2193 = vadd.f32 %v2191, %v2192
    %2198 = vrot.lane.b32.xlu0 %v2172, 126
    %v2199 = vpop.permute.xlu0 %2198
    %2200 = vrot.lane.b32.xlu0 %v2179, 126
    %v2201 = vpop.permute.xlu0 %2200
    %2202 = vrot.lane.b32.xlu0 %v2186, 126
    %v2203 = vpop.permute.xlu0 %2202
    %2204 = vrot.lane.b32.xlu0 %v2193, 126
    %v2205 = vpop.permute.xlu0 %2204
    %2210 = vrot.lane.b32.xlu0 %v2172, 14
    %v2211 = vpop.permute.xlu0 %2210
    %2212 = vrot.lane.b32.xlu0 %v2179, 14
    %v2213 = vpop.permute.xlu0 %2212
    %2214 = vrot.lane.b32.xlu0 %v2186, 14
    %v2215 = vpop.permute.xlu0 %2214
    %2216 = vrot.lane.b32.xlu0 %v2193, 14
    %v2217 = vpop.permute.xlu0 %2216
    %vm2222 = vcmask 113664
    %v2223 = vsel %vm2222, %v2199, %v2211
    %v2224 = vsel %vm2222, %v2201, %v2213
    %v2225 = vsel %vm2222, %v2203, %v2215
    %v2226 = vsel %vm2222, %v2205, %v2217
    %v2227 = vadd.s32 %v1934, 2
    %vm2228 = vcmp.lt.s32.totalorder %v2227, 8
    %v2229 = vsel %vm2228, %v2223, %v248
    %v2230 = vsel %vm2228, %v2224, %v249
    %v2231 = vsel %vm2228, %v2225, %v250
    %v2232 = vsel %vm2228, %v2226, %v251
    %v2234 = vunpack.c.l.s4 1966171168
    %v2235 = vunpack.c.0.s8 %v2234
    %v2236 = vlaneseq
    %v2237 = vshrl.u32 %v2236, 7
    %v2238 = vsub.s32 %v2235, %v2237
    %v2239 = vrot.slane %v2172, %v2238
    %v2240 = vcombine.high %v2239, %v2239
    %v2242 = vunpack.c.l.s4 1966171168
    %v2243 = vunpack.c.0.s8 %v2242
    %v2244 = vlaneseq
    %v2245 = vshrl.u32 %v2244, 7
    %v2246 = vsub.s32 %v2243, %v2245
    %v2247 = vrot.slane %v2239, %v2246
    %v2249 = vunpack.c.l.s4 1966171168
    %v2250 = vunpack.c.0.s8 %v2249
    %v2251 = vlaneseq
    %v2252 = vshrl.u32 %v2251, 7
    %v2253 = vsub.s32 %v2250, %v2252
    %v2254 = vrot.slane %v2240, %v2253
    %v2255 = vcombine.high %v2247, %v2247
    %v2256 = vcombine.high %v2254, %v2254
    %v2258 = vunpack.c.l.s4 1966171168
    %v2259 = vunpack.c.0.s8 %v2258
    %v2260 = vlaneseq
    %v2261 = vshrl.u32 %v2260, 7
    %v2262 = vsub.s32 %v2259, %v2261
    %v2263 = vrot.slane %v2179, %v2262
    %v2264 = vcombine.high %v2263, %v2263
    %v2266 = vunpack.c.l.s4 1966171168
    %v2267 = vunpack.c.0.s8 %v2266
    %v2268 = vlaneseq
    %v2269 = vshrl.u32 %v2268, 7
    %v2270 = vsub.s32 %v2267, %v2269
    %v2271 = vrot.slane %v2263, %v2270
    %v2273 = vunpack.c.l.s4 1966171168
    %v2274 = vunpack.c.0.s8 %v2273
    %v2275 = vlaneseq
    %v2276 = vshrl.u32 %v2275, 7
    %v2277 = vsub.s32 %v2274, %v2276
    %v2278 = vrot.slane %v2264, %v2277
    %v2279 = vcombine.high %v2271, %v2271
    %v2280 = vcombine.high %v2278, %v2278
    %v2282 = vunpack.c.l.s4 1966171168
    %v2283 = vunpack.c.0.s8 %v2282
    %v2284 = vlaneseq
    %v2285 = vshrl.u32 %v2284, 7
    %v2286 = vsub.s32 %v2283, %v2285
    %v2287 = vrot.slane %v2186, %v2286
    %v2288 = vcombine.high %v2287, %v2287
    %v2290 = vunpack.c.l.s4 1966171168
    %v2291 = vunpack.c.0.s8 %v2290
    %v2292 = vlaneseq
    %v2293 = vshrl.u32 %v2292, 7
    %v2294 = vsub.s32 %v2291, %v2293
    %v2295 = vrot.slane %v2287, %v2294
    %v2297 = vunpack.c.l.s4 1966171168
    %v2298 = vunpack.c.0.s8 %v2297
    %v2299 = vlaneseq
    %v2300 = vshrl.u32 %v2299, 7
    %v2301 = vsub.s32 %v2298, %v2300
    %v2302 = vrot.slane %v2288, %v2301
    %v2303 = vcombine.high %v2295, %v2295
    %v2304 = vcombine.high %v2302, %v2302
    %v2306 = vunpack.c.l.s4 1966171168
    %v2307 = vunpack.c.0.s8 %v2306
    %v2308 = vlaneseq
    %v2309 = vshrl.u32 %v2308, 7
    %v2310 = vsub.s32 %v2307, %v2309
    %v2311 = vrot.slane %v2193, %v2310
    %v2312 = vcombine.high %v2311, %v2311
    %v2314 = vunpack.c.l.s4 1966171168
    %v2315 = vunpack.c.0.s8 %v2314
    %v2316 = vlaneseq
    %v2317 = vshrl.u32 %v2316, 7
    %v2318 = vsub.s32 %v2315, %v2317
    %v2319 = vrot.slane %v2311, %v2318
    %v2321 = vunpack.c.l.s4 1966171168
    %v2322 = vunpack.c.0.s8 %v2321
    %v2323 = vlaneseq
    %v2324 = vshrl.u32 %v2323, 7
    %v2325 = vsub.s32 %v2322, %v2324
    %v2326 = vrot.slane %v2312, %v2325
    %v2327 = vcombine.high %v2319, %v2319
    %v2328 = vcombine.high %v2326, %v2326
    %v2329 = vlaneseq
    %v2330 = vshrl.u32 %v2329, 7
    %v2331 = vsub.s32 0, %v2330
    %v2332 = vrot.slane %v2247, %v2331
    %v2333 = vlaneseq
    %v2334 = vshrl.u32 %v2333, 7
    %v2335 = vsub.s32 0, %v2334
    %v2336 = vrot.slane %v2254, %v2335
    %v2337 = vlaneseq
    %v2338 = vshrl.u32 %v2337, 7
    %v2339 = vsub.s32 0, %v2338
    %v2340 = vrot.slane %v2255, %v2339
    %v2341 = vlaneseq
    %v2342 = vshrl.u32 %v2341, 7
    %v2343 = vsub.s32 0, %v2342
    %v2344 = vrot.slane %v2256, %v2343
    %v2345 = vlaneseq
    %v2346 = vshrl.u32 %v2345, 7
    %v2347 = vsub.s32 0, %v2346
    %v2348 = vrot.slane %v2271, %v2347
    %v2349 = vlaneseq
    %v2350 = vshrl.u32 %v2349, 7
    %v2351 = vsub.s32 0, %v2350
    %v2352 = vrot.slane %v2278, %v2351
    %v2353 = vlaneseq
    %v2354 = vshrl.u32 %v2353, 7
    %v2355 = vsub.s32 0, %v2354
    %v2356 = vrot.slane %v2279, %v2355
    %v2357 = vlaneseq
    %v2358 = vshrl.u32 %v2357, 7
    %v2359 = vsub.s32 0, %v2358
    %v2360 = vrot.slane %v2280, %v2359
    %v2361 = vlaneseq
    %v2362 = vshrl.u32 %v2361, 7
    %v2363 = vsub.s32 0, %v2362
    %v2364 = vrot.slane %v2295, %v2363
    %v2365 = vlaneseq
    %v2366 = vshrl.u32 %v2365, 7
    %v2367 = vsub.s32 0, %v2366
    %v2368 = vrot.slane %v2302, %v2367
    %v2369 = vlaneseq
    %v2370 = vshrl.u32 %v2369, 7
    %v2371 = vsub.s32 0, %v2370
    %v2372 = vrot.slane %v2303, %v2371
    %v2373 = vlaneseq
    %v2374 = vshrl.u32 %v2373, 7
    %v2375 = vsub.s32 0, %v2374
    %v2376 = vrot.slane %v2304, %v2375
    %v2377 = vlaneseq
    %v2378 = vshrl.u32 %v2377, 7
    %v2379 = vsub.s32 0, %v2378
    %v2380 = vrot.slane %v2319, %v2379
    %v2381 = vlaneseq
    %v2382 = vshrl.u32 %v2381, 7
    %v2383 = vsub.s32 0, %v2382
    %v2384 = vrot.slane %v2326, %v2383
    %v2385 = vlaneseq
    %v2386 = vshrl.u32 %v2385, 7
    %v2387 = vsub.s32 0, %v2386
    %v2388 = vrot.slane %v2327, %v2387
    %v2389 = vlaneseq
    %v2390 = vshrl.u32 %v2389, 7
    %v2391 = vsub.s32 0, %v2390
    %v2392 = vrot.slane %v2328, %v2391
    %v2409 = vmul.f32 %v2332, %v2229
    %v2410 = vmul.f32 %v2336, %v2230
    %v2411 = vmul.f32 %v2340, %v2231
    %v2412 = vmul.f32 %v2344, %v2232
    %v2413 = vmul.f32 %v2348, %v2229
    %v2414 = vmul.f32 %v2352, %v2230
    %v2415 = vmul.f32 %v2356, %v2231
    %v2416 = vmul.f32 %v2360, %v2232
    %v2417 = vmul.f32 %v2364, %v2229
    %v2418 = vmul.f32 %v2368, %v2230
    %v2419 = vmul.f32 %v2372, %v2231
    %v2420 = vmul.f32 %v2376, %v2232
    %v2421 = vmul.f32 %v2380, %v2229
    %v2422 = vmul.f32 %v2384, %v2230
    %v2423 = vmul.f32 %v2388, %v2231
    %v2424 = vmul.f32 %v2392, %v2232
    %v2425 = vsel %vm444, %v2409, 0.0
    %v2426 = vsel %vm444, %v2410, 0.0
    %v2427 = vadd.f32 %v2425, %v2426
    %v2428 = vsel %vm444, %v2411, 0.0
    %v2429 = vadd.f32 %v2427, %v2428
    %v2430 = vsel %vm444, %v2412, 0.0
    %v2431 = vadd.f32 %v2429, %v2430
    %v2432 = vsel %vm444, %v2413, 0.0
    %v2433 = vsel %vm444, %v2414, 0.0
    %v2434 = vadd.f32 %v2432, %v2433
    %v2435 = vsel %vm444, %v2415, 0.0
    %v2436 = vadd.f32 %v2434, %v2435
    %v2437 = vsel %vm444, %v2416, 0.0
    %v2438 = vadd.f32 %v2436, %v2437
    %v2439 = vsel %vm444, %v2417, 0.0
    %v2440 = vsel %vm444, %v2418, 0.0
    %v2441 = vadd.f32 %v2439, %v2440
    %v2442 = vsel %vm444, %v2419, 0.0
    %v2443 = vadd.f32 %v2441, %v2442
    %v2444 = vsel %vm444, %v2420, 0.0
    %v2445 = vadd.f32 %v2443, %v2444
    %v2446 = vsel %vm444, %v2421, 0.0
    %v2447 = vsel %vm444, %v2422, 0.0
    %v2448 = vadd.f32 %v2446, %v2447
    %v2449 = vsel %vm444, %v2423, 0.0
    %v2450 = vadd.f32 %v2448, %v2449
    %v2451 = vsel %vm444, %v2424, 0.0
    %v2452 = vadd.f32 %v2450, %v2451
    %2457 = vrot.lane.b32.xlu0 %v2431, 124
    %v2458 = vpop.permute.xlu0 %2457
    %2459 = vrot.lane.b32.xlu0 %v2438, 124
    %v2460 = vpop.permute.xlu0 %2459
    %2461 = vrot.lane.b32.xlu0 %v2445, 124
    %v2462 = vpop.permute.xlu0 %2461
    %2463 = vrot.lane.b32.xlu0 %v2452, 124
    %v2464 = vpop.permute.xlu0 %2463
    %2469 = vrot.lane.b32.xlu0 %v2431, 12
    %v2470 = vpop.permute.xlu0 %2469
    %2471 = vrot.lane.b32.xlu0 %v2438, 12
    %v2472 = vpop.permute.xlu0 %2471
    %2473 = vrot.lane.b32.xlu0 %v2445, 12
    %v2474 = vpop.permute.xlu0 %2473
    %2475 = vrot.lane.b32.xlu0 %v2452, 12
    %v2476 = vpop.permute.xlu0 %2475
    %vm2481 = vcmask 97280
    %v2482 = vsel %vm2481, %v2458, %v2470
    %v2483 = vsel %vm2481, %v2460, %v2472
    %v2484 = vsel %vm2481, %v2462, %v2474
    %v2485 = vsel %vm2481, %v2464, %v2476
    %v2486 = vadd.s32 %v1934, 4
    %vm2487 = vcmp.lt.s32.totalorder %v2486, 8
    %v2488 = vsel %vm2487, %v2482, %v248
    %v2489 = vsel %vm2487, %v2483, %v249
    %v2490 = vsel %vm2487, %v2484, %v250
    %v2491 = vsel %vm2487, %v2485, %v251
    %v2493 = vunpack.c.l.s4 1966171168
    %v2494 = vunpack.c.0.s8 %v2493
    %v2495 = vlaneseq
    %v2496 = vshrl.u32 %v2495, 7
    %v2497 = vsub.s32 %v2494, %v2496
    %v2498 = vrot.slane %v2431, %v2497
    %v2499 = vcombine.high %v2498, %v2498
    %v2501 = vunpack.c.l.s4 1966171168
    %v2502 = vunpack.c.0.s8 %v2501
    %v2503 = vlaneseq
    %v2504 = vshrl.u32 %v2503, 7
    %v2505 = vsub.s32 %v2502, %v2504
    %v2506 = vrot.slane %v2498, %v2505
    %v2508 = vunpack.c.l.s4 1966171168
    %v2509 = vunpack.c.0.s8 %v2508
    %v2510 = vlaneseq
    %v2511 = vshrl.u32 %v2510, 7
    %v2512 = vsub.s32 %v2509, %v2511
    %v2513 = vrot.slane %v2499, %v2512
    %v2514 = vcombine.high %v2506, %v2506
    %v2515 = vcombine.high %v2513, %v2513
    %v2517 = vunpack.c.l.s4 1966171168
    %v2518 = vunpack.c.0.s8 %v2517
    %v2519 = vlaneseq
    %v2520 = vshrl.u32 %v2519, 7
    %v2521 = vsub.s32 %v2518, %v2520
    %v2522 = vrot.slane %v2438, %v2521
    %v2523 = vcombine.high %v2522, %v2522
    %v2525 = vunpack.c.l.s4 1966171168
    %v2526 = vunpack.c.0.s8 %v2525
    %v2527 = vlaneseq
    %v2528 = vshrl.u32 %v2527, 7
    %v2529 = vsub.s32 %v2526, %v2528
    %v2530 = vrot.slane %v2522, %v2529
    %v2532 = vunpack.c.l.s4 1966171168
    %v2533 = vunpack.c.0.s8 %v2532
    %v2534 = vlaneseq
    %v2535 = vshrl.u32 %v2534, 7
    %v2536 = vsub.s32 %v2533, %v2535
    %v2537 = vrot.slane %v2523, %v2536
    %v2538 = vcombine.high %v2530, %v2530
    %v2539 = vcombine.high %v2537, %v2537
    %v2541 = vunpack.c.l.s4 1966171168
    %v2542 = vunpack.c.0.s8 %v2541
    %v2543 = vlaneseq
    %v2544 = vshrl.u32 %v2543, 7
    %v2545 = vsub.s32 %v2542, %v2544
    %v2546 = vrot.slane %v2445, %v2545
    %v2547 = vcombine.high %v2546, %v2546
    %v2549 = vunpack.c.l.s4 1966171168
    %v2550 = vunpack.c.0.s8 %v2549
    %v2551 = vlaneseq
    %v2552 = vshrl.u32 %v2551, 7
    %v2553 = vsub.s32 %v2550, %v2552
    %v2554 = vrot.slane %v2546, %v2553
    %v2556 = vunpack.c.l.s4 1966171168
    %v2557 = vunpack.c.0.s8 %v2556
    %v2558 = vlaneseq
    %v2559 = vshrl.u32 %v2558, 7
    %v2560 = vsub.s32 %v2557, %v2559
    %v2561 = vrot.slane %v2547, %v2560
    %v2562 = vcombine.high %v2554, %v2554
    %v2563 = vcombine.high %v2561, %v2561
    %v2565 = vunpack.c.l.s4 1966171168
    %v2566 = vunpack.c.0.s8 %v2565
    %v2567 = vlaneseq
    %v2568 = vshrl.u32 %v2567, 7
    %v2569 = vsub.s32 %v2566, %v2568
    %v2570 = vrot.slane %v2452, %v2569
    %v2571 = vcombine.high %v2570, %v2570
    %v2573 = vunpack.c.l.s4 1966171168
    %v2574 = vunpack.c.0.s8 %v2573
    %v2575 = vlaneseq
    %v2576 = vshrl.u32 %v2575, 7
    %v2577 = vsub.s32 %v2574, %v2576
    %v2578 = vrot.slane %v2570, %v2577
    %v2580 = vunpack.c.l.s4 1966171168
    %v2581 = vunpack.c.0.s8 %v2580
    %v2582 = vlaneseq
    %v2583 = vshrl.u32 %v2582, 7
    %v2584 = vsub.s32 %v2581, %v2583
    %v2585 = vrot.slane %v2571, %v2584
    %v2586 = vcombine.high %v2578, %v2578
    %v2587 = vcombine.high %v2585, %v2585
    %v2588 = vlaneseq
    %v2589 = vshrl.u32 %v2588, 7
    %v2590 = vsub.s32 0, %v2589
    %v2591 = vrot.slane %v2506, %v2590
    %v2592 = vlaneseq
    %v2593 = vshrl.u32 %v2592, 7
    %v2594 = vsub.s32 0, %v2593
    %v2595 = vrot.slane %v2513, %v2594
    %v2596 = vlaneseq
    %v2597 = vshrl.u32 %v2596, 7
    %v2598 = vsub.s32 0, %v2597
    %v2599 = vrot.slane %v2514, %v2598
    %v2600 = vlaneseq
    %v2601 = vshrl.u32 %v2600, 7
    %v2602 = vsub.s32 0, %v2601
    %v2603 = vrot.slane %v2515, %v2602
    %v2604 = vlaneseq
    %v2605 = vshrl.u32 %v2604, 7
    %v2606 = vsub.s32 0, %v2605
    %v2607 = vrot.slane %v2530, %v2606
    %v2608 = vlaneseq
    %v2609 = vshrl.u32 %v2608, 7
    %v2610 = vsub.s32 0, %v2609
    %v2611 = vrot.slane %v2537, %v2610
    %v2612 = vlaneseq
    %v2613 = vshrl.u32 %v2612, 7
    %v2614 = vsub.s32 0, %v2613
    %v2615 = vrot.slane %v2538, %v2614
    %v2616 = vlaneseq
    %v2617 = vshrl.u32 %v2616, 7
    %v2618 = vsub.s32 0, %v2617
    %v2619 = vrot.slane %v2539, %v2618
    %v2620 = vlaneseq
    %v2621 = vshrl.u32 %v2620, 7
    %v2622 = vsub.s32 0, %v2621
    %v2623 = vrot.slane %v2554, %v2622
    %v2624 = vlaneseq
    %v2625 = vshrl.u32 %v2624, 7
    %v2626 = vsub.s32 0, %v2625
    %v2627 = vrot.slane %v2561, %v2626
    %v2628 = vlaneseq
    %v2629 = vshrl.u32 %v2628, 7
    %v2630 = vsub.s32 0, %v2629
    %v2631 = vrot.slane %v2562, %v2630
    %v2632 = vlaneseq
    %v2633 = vshrl.u32 %v2632, 7
    %v2634 = vsub.s32 0, %v2633
    %v2635 = vrot.slane %v2563, %v2634
    %v2636 = vlaneseq
    %v2637 = vshrl.u32 %v2636, 7
    %v2638 = vsub.s32 0, %v2637
    %v2639 = vrot.slane %v2578, %v2638
    %v2640 = vlaneseq
    %v2641 = vshrl.u32 %v2640, 7
    %v2642 = vsub.s32 0, %v2641
    %v2643 = vrot.slane %v2585, %v2642
    %v2644 = vlaneseq
    %v2645 = vshrl.u32 %v2644, 7
    %v2646 = vsub.s32 0, %v2645
    %v2647 = vrot.slane %v2586, %v2646
    %v2648 = vlaneseq
    %v2649 = vshrl.u32 %v2648, 7
    %v2650 = vsub.s32 0, %v2649
    %v2651 = vrot.slane %v2587, %v2650
    %v2668 = vmul.f32 %v2591, %v2488
    %v2669 = vmul.f32 %v2595, %v2489
    %v2670 = vmul.f32 %v2599, %v2490
    %v2671 = vmul.f32 %v2603, %v2491
    %v2672 = vmul.f32 %v2607, %v2488
    %v2673 = vmul.f32 %v2611, %v2489
    %v2674 = vmul.f32 %v2615, %v2490
    %v2675 = vmul.f32 %v2619, %v2491
    %v2676 = vmul.f32 %v2623, %v2488
    %v2677 = vmul.f32 %v2627, %v2489
    %v2678 = vmul.f32 %v2631, %v2490
    %v2679 = vmul.f32 %v2635, %v2491
    %v2680 = vmul.f32 %v2639, %v2488
    %v2681 = vmul.f32 %v2643, %v2489
    %v2682 = vmul.f32 %v2647, %v2490
    %v2683 = vmul.f32 %v2651, %v2491
    %v2684 = vsel %vm444, %v2668, 0.0
    %v2685 = vsel %vm444, %v2669, 0.0
    %v2686 = vadd.f32 %v2684, %v2685
    %v2687 = vsel %vm444, %v2670, 0.0
    %v2688 = vadd.f32 %v2686, %v2687
    %v2689 = vsel %vm444, %v2671, 0.0
    %v2690 = vadd.f32 %v2688, %v2689
    %v2691 = vsel %vm444, %v2672, 0.0
    %v2692 = vsel %vm444, %v2673, 0.0
    %v2693 = vadd.f32 %v2691, %v2692
    %v2694 = vsel %vm444, %v2674, 0.0
    %v2695 = vadd.f32 %v2693, %v2694
    %v2696 = vsel %vm444, %v2675, 0.0
    %v2697 = vadd.f32 %v2695, %v2696
    %v2698 = vsel %vm444, %v2676, 0.0
    %v2699 = vsel %vm444, %v2677, 0.0
    %v2700 = vadd.f32 %v2698, %v2699
    %v2701 = vsel %vm444, %v2678, 0.0
    %v2702 = vadd.f32 %v2700, %v2701
    %v2703 = vsel %vm444, %v2679, 0.0
    %v2704 = vadd.f32 %v2702, %v2703
    %v2705 = vsel %vm444, %v2680, 0.0
    %v2706 = vsel %vm444, %v2681, 0.0
    %v2707 = vadd.f32 %v2705, %v2706
    %v2708 = vsel %vm444, %v2682, 0.0
    %v2709 = vadd.f32 %v2707, %v2708
    %v2710 = vsel %vm444, %v2683, 0.0
    %v2711 = vadd.f32 %v2709, %v2710
    %2716 = vrot.lane.b32.xlu0 %v2690, 121
    %v2717 = vpop.permute.xlu0 %2716
    %2718 = vrot.lane.b32.xlu0 %v2697, 121
    %v2719 = vpop.permute.xlu0 %2718
    %2720 = vrot.lane.b32.xlu0 %v2704, 121
    %v2721 = vpop.permute.xlu0 %2720
    %2722 = vrot.lane.b32.xlu0 %v2711, 121
    %v2723 = vpop.permute.xlu0 %2722
    %vm2728 = vcmask 7168
    %v2729 = vsel %vm2728, %v2690, %v2717
    %v2730 = vsel %vm2728, %v2697, %v2719
    %v2731 = vsel %vm2728, %v2704, %v2721
    %v2732 = vsel %vm2728, %v2711, %v2723
    %v2733 = vld [vmem:[%s3] sm:$0xff]
    %v2734 = vld [vmem:[%s3 + $0x8] sm:$0xff]
    %v2735 = vld [vmem:[%s4] sm:$0x1]
    %v2737 = vlaneseq
    %v2738 = vshrl.u32 %v2737, 7
    %v2739 = vsub.s32 0, %v2738
    %v2740 = vrot.slane %v2735, %v2739
    %v2746 = vcombine.low %v2729, %v2730
    %v2747 = vcombine.low %v2731, %v2732
    %2750 = vxpose.xlu0.b32.start [1/16] %v2746, 128
    %2751 = vxpose.xlu0.b32.cont [2/16] %v2747, 128
    %2752 = vxpose.xlu0.b32.cont [3/16] 0.0, 128
    %2753 = vxpose.xlu0.b32.cont [4/16] 0.0, 128
    %2754 = vxpose.xlu0.b32.cont [5/16] 0.0, 128
    %2755 = vxpose.xlu0.b32.cont [6/16] 0.0, 128
    %2756 = vxpose.xlu0.b32.cont [7/16] 0.0, 128
    %2757 = vxpose.xlu0.b32.cont [8/16] 0.0, 128
    %2758 = vxpose.xlu0.b32.cont [9/16] 0.0, 128
    %2759 = vxpose.xlu0.b32.cont [10/16] 0.0, 128
    %2760 = vxpose.xlu0.b32.cont [11/16] 0.0, 128
    %2761 = vxpose.xlu0.b32.cont [12/16] 0.0, 128
    %2762 = vxpose.xlu0.b32.cont [13/16] 0.0, 128
    %2763 = vxpose.xlu0.b32.cont [14/16] 0.0, 128
    %2764 = vxpose.xlu0.b32.cont [15/16] 0.0, 128
    %2765 = vxpose.xlu0.b32.end [16/16] 0.0, 128
    %v2766 = vpop.trf.xlu0
    %v2767 = vpop.trf.xlu0
    %v2768 = vpop.trf.xlu0
    %v2769 = vpop.trf.xlu0
    %v2770 = vpop.trf.xlu0
    %v2771 = vpop.trf.xlu0
    %v2772 = vpop.trf.xlu0
    %v2773 = vpop.trf.xlu0
    %v2774 = vpop.trf.xlu0
    %v2775 = vpop.trf.xlu0
    %v2776 = vpop.trf.xlu0
    %v2777 = vpop.trf.xlu0
    %v2778 = vpop.trf.xlu0
    %v2779 = vpop.trf.xlu0
    %v2780 = vpop.trf.xlu0
    %v2781 = vpop.trf.xlu0
    %vm2782 = vcmask 130048
    %v2784 = vsel %vm2782, %v2766, 0
    %2786 = vmatprep.subr.mxu0 0.0
    %2787 = vmatpush1.msra.mxu0 0.0
    %2788 = vmatprep.subr.mxu0 0.0
    %2789 = vmatpush1.msra.mxu0 0.0
    %2790 = vmatprep.subr.mxu0 0.0
    %2791 = vmatpush1.msra.mxu0 0.0
    %2792 = vmatprep.subr.mxu0 0.0
    %2793 = vmatpush1.msra.mxu0 0.0
    %2794 = vmatprep.subr.mxu0 0.0
    %2795 = vmatpush1.msra.mxu0 0.0
    %2796 = vmatprep.subr.mxu0 0.0
    %2797 = vmatpush1.msra.mxu0 0.0
    %2798 = vmatprep.subr.mxu0 0.0
    %2799 = vmatpush1.msra.mxu0 0.0
    %2800 = vmatprep.subr.mxu0 0.0
    %2801 = vmatpush1.msra.mxu0 0.0
    %2802 = vmatprep.subr.mxu0 0.0
    %2803 = vmatpush1.msra.mxu0 0.0
    %2804 = vmatprep.subr.mxu0 0.0
    %2805 = vmatpush1.msra.mxu0 0.0
    %2806 = vmatprep.subr.mxu0 0.0
    %2807 = vmatpush1.msra.mxu0 0.0
    %2808 = vmatprep.subr.mxu0 0.0
    %2809 = vmatpush1.msra.mxu0 0.0
    %2810 = vmatprep.subr.mxu0 0.0
    %2811 = vmatpush1.msra.mxu0 0.0
    %2812 = vmatprep.subr.mxu0 0.0
    %2813 = vmatpush1.msra.mxu0 0.0
    %2814 = vmatprep.subr.mxu0 0.0
    %2815 = vmatpush1.msra.mxu0 %v2734
    %2816 = vmatprep.subr.mxu0 0.0
    %2817 = vmatpush1.msra.mxu0 %v2733
    %2818 = vmatprep.subr.mxu0 0.0
    %2819 = vmatpush2.msra.mxu0 0.0
    %2820 = vmatprep.subr.mxu0 0.0
    %2821 = vmatpush2.msra.mxu0 0.0
    %2822 = vmatprep.subr.mxu0 0.0
    %2823 = vmatpush2.msra.mxu0 0.0
    %2824 = vmatprep.subr.mxu0 0.0
    %2825 = vmatpush2.msra.mxu0 0.0
    %2826 = vmatprep.subr.mxu0 0.0
    %2827 = vmatpush2.msra.mxu0 0.0
    %2828 = vmatprep.subr.mxu0 0.0
    %2829 = vmatpush2.msra.mxu0 0.0
    %2830 = vmatprep.subr.mxu0 0.0
    %2831 = vmatpush2.msra.mxu0 0.0
    %2832 = vmatprep.subr.mxu0 0.0
    %2833 = vmatpush2.msra.mxu0 0.0
    %2834 = vmatprep.subr.mxu0 0.0
    %2835 = vmatpush2.msra.mxu0 0.0
    %2836 = vmatprep.subr.mxu0 0.0
    %2837 = vmatpush2.msra.mxu0 0.0
    %2838 = vmatprep.subr.mxu0 0.0
    %2839 = vmatpush2.msra.mxu0 0.0
    %2840 = vmatprep.subr.mxu0 0.0
    %2841 = vmatpush2.msra.mxu0 0.0
    %2842 = vmatprep.subr.mxu0 0.0
    %2843 = vmatpush2.msra.mxu0 0.0
    %2844 = vmatprep.subr.mxu0 0.0
    %2845 = vmatpush2.msra.mxu0 0.0
    %2846 = vmatprep.subr.mxu0 0.0
    %2847 = vmatpush2.msra.mxu0 0.0
    %2848 = vmatprep.subr.mxu0 0.0
    %2849 = vmatpush2.msra.mxu0 0.0
    %2850 = vmatprep.mubr.f32.mxu0 0.0
    %2851 = vmatmul.mubr.f32.gmra.mxu0 %v2784
    %v2852 = vpop.f32.mrf.mxu0
    %v2853 = vadd.f32 %v2740, %v2852
    %v2854 = vpop.f32.mrf.mxu0
    %2855 = vdwg.mxu0
    %v2856 = vmax.f32 %v2853, 0.0
    %vm2857 = vcmask 254976
    %2858 = vst.msk [vmem:[#allocation2] sm:$0x3] %vm2857, %v2856
    // Predicated region
    $region22: #{tpu_custom_call.1} parent=1 // pred_check
      _
    $region23: #{tpu_custom_call.1} parent=1 // pred_check_branch
      %2860 = sbr.rel (0) target = $region25
    $region24: #{tpu_custom_call.1} parent=1 // pred_region
      %s2862 = ssub.s32 32, 32
      %2863 = vsyncadd [#allocation3], %s2862
      %s2865 = sshll.u32 [#allocation2], 4
      %s2866 = int_to_ptr.vmem [resolvable:$true] %s2865
      %2868 = dma.vmem_to_hbm [thread:$0]  %s2866, 32, %s5, [#allocation3]
    $region25: #{tpu_custom_call.1} parent=1 // pred_fallthru
      _
    // Predicated region
    $region26: #{tpu_custom_call.1} parent=1 // pred_check
      _
    $region27: #{tpu_custom_call.1} parent=1 // pred_check_branch
      %2870 = sbr.rel (0) target = $region29
    $region28: #{tpu_custom_call.1} parent=1 // pred_region
      %2871 = dma.done [#allocation3], 32
    $region29: #{tpu_custom_call.1} parent=1 // pred_fallthru
      _
    %2872 = vsyncpa [#allocation3], 1

</llo_original>
